<compile_context>
chip_gen: v7x
topology: tpu7x:2x2x1
jax: 0.10.0
libtpu: 0.0.40
codegen_flags: <defaults>
</compile_context>

<pallas_src>
import jax
import jax.numpy as jnp
from jax.experimental import pallas as pl
from jax.experimental.pallas import tpu as pltpu


# -----------------------------------------------------------------------------
# Kernel: fused block-diagonal MLP for all three heads (transposed dataflow)
# -----------------------------------------------------------------------------
def quadratic_head_kernel(t_ref, l1_ref, w_ref, b_ref, wlast_ref, out_ref):
    t = t_ref[...]                       # (1, TILE_N) f32
    t2 = t * t

    # Layer 1 (K=2) on the VPU: h = relu(w_t * t + w_t2 * t^2 + b), transposed.
    # l1_ref columns: 0 -> weights for t, 1 -> weights for t^2, 2 -> bias.
    h = jnp.maximum(
        l1_ref[:, 0:1] * t + l1_ref[:, 1:2] * t2 + l1_ref[:, 2:3], 0.0
    )                                    # (LW, TILE_N) f32

    # Middle block-diagonal layers: h <- relu(W^T @ h + b). bf16 dot, f32 acc,
    # bias add / ReLU in f32.
    n_mid = w_ref.shape[0]               # static
    for li in range(n_mid):
        z = jnp.dot(w_ref[li], h.astype(jnp.bfloat16),
                    preferred_element_type=jnp.float32)   # (LW, TILE_N) f32
        h = jnp.maximum(z + b_ref[li], 0.0)

    # Final block-diagonal projection -> (3, TILE_N): rows = (A2, A1, b).
    out_ref[...] = jnp.dot(wlast_ref[...], h.astype(jnp.bfloat16),
                           preferred_element_type=jnp.float32)


# -----------------------------------------------------------------------------
# Parameter construction (deterministic, PyTorch-like uniform(-1/sqrt(fan_in)))
# -----------------------------------------------------------------------------
def _linear_params(key, fan_in, fan_out, bias=True):
    kw, kb = jax.random.split(key)
    bound = 1.0 / jnp.sqrt(jnp.float32(fan_in))
    W = jax.random.uniform(kw, (fan_in, fan_out), jnp.float32, -bound, bound)
    if not bias:
        return (W,)
    b = jax.random.uniform(kb, (1, fan_out), jnp.float32, -bound, bound)
    return (W, b)


def make_params(key, feat_dim, hidden_dim):
    H = hidden_dim
    keys = jax.random.split(key, 16)
    params = []
    # quadratic head: F -> H -> H/2 -> H/4 -> 1 (last no bias)
    params += _linear_params(keys[0], feat_dim, H)
    params += _linear_params(keys[1], H, H // 2)
    params += _linear_params(keys[2], H // 2, H // 4)
    params += _linear_params(keys[3], H // 4, 1, bias=False)
    # linear head: F -> H -> 2H -> H -> H/2 -> H/4 -> 1 (last no bias)
    params += _linear_params(keys[4], feat_dim, H)
    params += _linear_params(keys[5], H, H * 2)
    params += _linear_params(keys[6], H * 2, H)
    params += _linear_params(keys[7], H, H // 2)
    params += _linear_params(keys[8], H // 2, H // 4)
    params += _linear_params(keys[9], H // 4, 1, bias=False)
    # bias head: F -> H -> H -> H/4 -> 1 (last no bias)
    params += _linear_params(keys[10], feat_dim, H)
    params += _linear_params(keys[11], H, H)
    params += _linear_params(keys[12], H, H // 4)
    params += _linear_params(keys[13], H // 4, 1, bias=False)
    return tuple(params)


# -----------------------------------------------------------------------------
# Pack per-head layer params into fused block-diagonal slabs (TRANSPOSED layout)
# -----------------------------------------------------------------------------
def pack_fused_params(params):
    p = list(params)
    q = [(p[0], p[1]), (p[2], p[3]), (p[4], p[5]), (p[6], None)]
    l = [(p[7], p[8]), (p[9], p[10]), (p[11], p[12]), (p[13], p[14]),
         (p[15], p[16]), (p[17], None)]
    b = [(p[18], p[19]), (p[20], p[21]), (p[22], p[23]), (p[24], None)]

    depth = max(len(q), len(l), len(b))

    # Pad shorter heads with identity / zero-bias layers right before their final
    # projection. Exact through ReLU because activations there are post-ReLU (>=0).
    def pad_head(layers):
        *body, last = layers
        while len(body) + 1 < depth:
            w = body[-1][0].shape[1]
            body.append((jnp.eye(w, dtype=jnp.float32),
                         jnp.zeros((1, w), jnp.float32)))
        return body + [last]

    heads = [pad_head(q), pad_head(l), pad_head(b)]

    # Fused width (pad every hidden activation to a multiple of 128 sublanes).
    out_widths = [sum(h[li][0].shape[1] for h in heads) for li in range(depth)]
    LW = max(128, ((max(out_widths[:-1]) + 127) // 128) * 128)

    F = heads[0][0][0].shape[0]          # input feature dim (= 2: t, t^2)
    assert F == 2, "only the [t, t^2] feature path is implemented"

    # Layer-1 slab, transposed: (LW, 8) f32; col 0 = w_t, col 1 = w_t2, col 2 = bias.
    l1_slab = jnp.zeros((LW, 8), jnp.float32)
    off = 0
    for W, bias in (h[0] for h in heads):
        w_out = W.shape[1]
        l1_slab = l1_slab.at[off:off + w_out, 0].set(W[0])
        l1_slab = l1_slab.at[off:off + w_out, 1].set(W[1])
        l1_slab = l1_slab.at[off:off + w_out, 2].set(bias[0])
        off += w_out

    # Middle layers (indices 1 .. depth-2): block-diagonal, stored TRANSPOSED
    # (out, in) so the kernel computes W^T @ h. Biases stored as columns (LW, 1).
    n_mid = depth - 2
    W_slab = jnp.zeros((n_mid, LW, LW), jnp.float32)
    B_slab = jnp.zeros((n_mid, LW, 1), jnp.float32)
    for li in range(1, depth - 1):
        in_off = 0
        out_off = 0
        for h in heads:
            W, bias = h[li]
            kin, kout = W.shape
            W_slab = W_slab.at[li - 1, out_off:out_off + kout,
                               in_off:in_off + kin].set(W.T)
            B_slab = B_slab.at[li - 1, out_off:out_off + kout, 0].set(bias[0])
            in_off += kin
            out_off += kout

    # Final layer, transposed: (3, LW); output rows = (A2, A1, b).
    W_last = jnp.zeros((3, LW), jnp.float32)
    in_off = 0
    for row, h in enumerate(heads):
        W, _ = h[depth - 1]              # (kin, 1)
        kin = W.shape[0]
        W_last = W_last.at[row, in_off:in_off + kin].set(W[:, 0])
        in_off += kin

    # Matmul operands in bf16 (f32 accumulation in-kernel); layer-1 / bias in f32.
    return (l1_slab,
            W_slab.astype(jnp.bfloat16),
            B_slab,
            W_last.astype(jnp.bfloat16))


# -----------------------------------------------------------------------------
# Wrapper
# -----------------------------------------------------------------------------
@jax.jit
def quadratic_head_forward(t, packed):
    """t: (B, S) float32 -> (A2, A1, b), each (B, S, 1) float32."""
    l1_slab, w_slab, b_slab, w_last = packed
    B, S = t.shape
    N = B * S

    # Tile selection: big lane-dense tiles to amortize per-grid-step overhead,
    # but keep >= 2 grid steps for mid-sized N so both v7x TCs get work.
    MAX_TILE = 8192
    n128 = ((N + 127) // 128) * 128
    if n128 <= MAX_TILE:
        TILE_N = n128
    elif n128 <= 2 * MAX_TILE:
        TILE_N = (((n128 // 2) + 127) // 128) * 128
    else:
        TILE_N = MAX_TILE
    N_pad = ((N + TILE_N - 1) // TILE_N) * TILE_N

    t_row = t.reshape(1, N).astype(jnp.float32)
    if N_pad != N:
        t_row = jnp.pad(t_row, ((0, 0), (0, N_pad - N)))

    grid = (N_pad // TILE_N,)

    out = pl.pallas_call(
        quadratic_head_kernel,
        out_shape=jax.ShapeDtypeStruct((3, N_pad), jnp.float32),
        grid_spec=pltpu.PrefetchScalarGridSpec(
            num_scalar_prefetch=0,
            grid=grid,
            in_specs=[
                pl.BlockSpec((1, TILE_N), lambda i: (0, i)),        # t (lane-dense)
                pl.BlockSpec(l1_slab.shape, lambda i: (0, 0)),      # layer-1 slab
                pl.BlockSpec(w_slab.shape, lambda i: (0, 0, 0)),    # mid weights^T (bf16)
                pl.BlockSpec(b_slab.shape, lambda i: (0, 0, 0)),    # mid bias columns
                pl.BlockSpec(w_last.shape, lambda i: (0, 0)),       # final proj^T (bf16)
            ],
            out_specs=pl.BlockSpec((3, TILE_N), lambda i: (0, i)),  # lane-dense output
        ),
        compiler_params=pltpu.CompilerParams(
            dimension_semantics=("parallel",),
            vmem_limit_bytes=48 * 1024 * 1024,   # fits v7x (64 MiB) with headroom
        ),
    )(t_row, l1_slab, w_slab, b_slab, w_last)

    A2 = out[0, :N].reshape(B, S, 1)
    A1 = out[1, :N].reshape(B, S, 1)
    bias_out = out[2, :N].reshape(B, S, 1)
    return A2, A1, bias_out


# -----------------------------------------------------------------------------
# Reference (plain JAX, f32) for sanity checking
# -----------------------------------------------------------------------------
def reference_forward(t, params):
    B, S = t.shape
    x = jnp.stack([t, t * t], axis=-1).reshape(B * S, 2)

    def mlp(h, layers):
        for W, b in layers[:-1]:
            h = jnp.maximum(h @ W + b, 0.0)
        return h @ layers[-1][0]

    p = list(params)
    q = [(p[0], p[1]), (p[2], p[3]), (p[4], p[5]), (p[6], None)]
    l = [(p[7], p[8]), (p[9], p[10]), (p[11], p[12]), (p[13], p[14]),
         (p[15], p[16]), (p[17], None)]
    bb = [(p[18], p[19]), (p[20], p[21]), (p[22], p[23]), (p[24], None)]
    return (mlp(x, q).reshape(B, S, 1),
            mlp(x, l).reshape(B, S, 1),
            mlp(x, bb).reshape(B, S, 1))


if __name__ == "__main__":
    key = jax.random.PRNGKey(0)
    k_t, k_p = jax.random.split(key)

    B, S = 2, 8
    hidden_dim = 32
    feat_dim = 2  # input_dim=1 -> +1 for t^2 (use_alpha_gamma=False)

    t = jax.random.normal(k_t, (B, S), jnp.float32)
    params = make_params(k_p, feat_dim, hidden_dim)
    packed = pack_fused_params(params)

    A2, A1, b = quadratic_head_forward(t, packed)
    jax.block_until_ready((A2, A1, b))

    A2_ref, A1_ref, b_ref = reference_forward(t, params)
    assert A2.shape == (B, S, 1) and A1.shape == (B, S, 1) and b.shape == (B, S, 1)
    # Tolerances loosened vs f32 reference because the dots run in bf16 (f32 acc).
    assert jnp.allclose(A2, A2_ref, atol=2e-2, rtol=2e-2)
    assert jnp.allclose(A1, A1_ref, atol=2e-2, rtol=2e-2)
    assert jnp.allclose(b, b_ref, atol=2e-2, rtol=2e-2)

    print("KERNEL_OK")
</pallas_src>

<mosaic_0001>
module attributes {stable_mosaic.version = 11 : i64} {
  func.func @quadratic_head_kernel(%arg0: i32, %arg1: memref<1x128xf32, #tpu.memory_space<vmem>>, %arg2: memref<128x8xf32, #tpu.memory_space<vmem>>, %arg3: memref<4x128x128xbf16, #tpu.memory_space<vmem>>, %arg4: memref<4x128x1xf32, #tpu.memory_space<vmem>>, %arg5: memref<3x128xbf16, #tpu.memory_space<vmem>>, %arg6: memref<3x128xf32, #tpu.memory_space<vmem>>) attributes {dimension_semantics = [#tpu.dimension_semantics<parallel>], iteration_bounds = array<i64: 1>, scalar_prefetch = 0 : i64, scratch_operands = 0 : i64, tpu.core_type = #tpu.core_type<tc>, window_params = [{transform_indices = @transform_0, window_bounds = array<i64: 1, 128>}, {pipeline_mode = #tpu.pipeline_mode<synchronous>, transform_indices = @transform_1, window_bounds = array<i64: 128, 8>}, {pipeline_mode = #tpu.pipeline_mode<synchronous>, transform_indices = @transform_2, window_bounds = array<i64: 4, 128, 128>}, {pipeline_mode = #tpu.pipeline_mode<synchronous>, transform_indices = @transform_3, window_bounds = array<i64: 4, 128, 1>}, {pipeline_mode = #tpu.pipeline_mode<synchronous>, transform_indices = @transform_4, window_bounds = array<i64: 3, 128>}, {transform_indices = @transform_5, window_bounds = array<i64: 3, 128>}]} {
    %c0 = arith.constant 0 : index
    %c0_0 = arith.constant 0 : index
    %0 = vector.load %arg1[%c0, %c0_0] : memref<1x128xf32, #tpu.memory_space<vmem>>, vector<1x128xf32>
    %1 = arith.mulf %0, %0 : vector<1x128xf32>
    %c0_1 = arith.constant 0 : index
    %c0_2 = arith.constant 0 : index
    %2 = vector.load %arg2[%c0_1, %c0_2] : memref<128x8xf32, #tpu.memory_space<vmem>>, vector<128x1xf32>
    %3 = vector.broadcast %2 : vector<128x1xf32> to vector<128x128xf32>
    %4 = vector.broadcast %0 : vector<1x128xf32> to vector<128x128xf32>
    %5 = arith.mulf %3, %4 : vector<128x128xf32>
    %c0_3 = arith.constant 0 : index
    %c1 = arith.constant 1 : index
    %6 = vector.load %arg2[%c0_3, %c1] : memref<128x8xf32, #tpu.memory_space<vmem>>, vector<128x1xf32>
    %7 = vector.broadcast %6 : vector<128x1xf32> to vector<128x128xf32>
    %8 = vector.broadcast %1 : vector<1x128xf32> to vector<128x128xf32>
    %9 = arith.mulf %7, %8 : vector<128x128xf32>
    %10 = arith.addf %5, %9 : vector<128x128xf32>
    %c0_4 = arith.constant 0 : index
    %c2 = arith.constant 2 : index
    %11 = vector.load %arg2[%c0_4, %c2] : memref<128x8xf32, #tpu.memory_space<vmem>>, vector<128x1xf32>
    %12 = vector.broadcast %11 : vector<128x1xf32> to vector<128x128xf32>
    %13 = arith.addf %10, %12 : vector<128x128xf32>
    %cst = arith.constant 0.000000e+00 : f32
    %14 = vector.broadcast %cst : f32 to vector<128x128xf32>
    %15 = arith.maximumf %13, %14 : vector<128x128xf32>
    %c0_5 = arith.constant 0 : index
    %c0_6 = arith.constant 0 : index
    %c0_7 = arith.constant 0 : index
    %16 = vector.load %arg3[%c0_5, %c0_6, %c0_7] : memref<4x128x128xbf16, #tpu.memory_space<vmem>>, vector<1x128x128xbf16>
    %17 = vector.shape_cast %16 : vector<1x128x128xbf16> to vector<128x128xbf16>
    %18 = arith.truncf %15 : vector<128x128xf32> to vector<128x128xbf16>
    %cst_8 = arith.constant dense<0.000000e+00> : vector<128x128xf32>
    %19 = tpu.matmul %17, %18, %cst_8 {dimension_numbers = #tpu.dot_dimension_numbers<[1], [0], [0], [1], [0, 0, 1, 1], [], []>} : vector<128x128xbf16>, vector<128x128xbf16>, vector<128x128xf32> -> vector<128x128xf32>
    %c0_9 = arith.constant 0 : index
    %c0_10 = arith.constant 0 : index
    %c0_11 = arith.constant 0 : index
    %20 = vector.load %arg4[%c0_9, %c0_10, %c0_11] : memref<4x128x1xf32, #tpu.memory_space<vmem>>, vector<1x128x1xf32>
    %21 = vector.shape_cast %20 : vector<1x128x1xf32> to vector<128x1xf32>
    %22 = vector.broadcast %21 : vector<128x1xf32> to vector<128x128xf32>
    %23 = arith.addf %19, %22 : vector<128x128xf32>
    %cst_12 = arith.constant 0.000000e+00 : f32
    %24 = vector.broadcast %cst_12 : f32 to vector<128x128xf32>
    %25 = arith.maximumf %23, %24 : vector<128x128xf32>
    %c1_13 = arith.constant 1 : index
    %c0_14 = arith.constant 0 : index
    %c0_15 = arith.constant 0 : index
    %26 = vector.load %arg3[%c1_13, %c0_14, %c0_15] : memref<4x128x128xbf16, #tpu.memory_space<vmem>>, vector<1x128x128xbf16>
    %27 = vector.shape_cast %26 : vector<1x128x128xbf16> to vector<128x128xbf16>
    %28 = arith.truncf %25 : vector<128x128xf32> to vector<128x128xbf16>
    %cst_16 = arith.constant dense<0.000000e+00> : vector<128x128xf32>
    %29 = tpu.matmul %27, %28, %cst_16 {dimension_numbers = #tpu.dot_dimension_numbers<[1], [0], [0], [1], [0, 0, 1, 1], [], []>} : vector<128x128xbf16>, vector<128x128xbf16>, vector<128x128xf32> -> vector<128x128xf32>
    %c1_17 = arith.constant 1 : index
    %c0_18 = arith.constant 0 : index
    %c0_19 = arith.constant 0 : index
    %30 = vector.load %arg4[%c1_17, %c0_18, %c0_19] : memref<4x128x1xf32, #tpu.memory_space<vmem>>, vector<1x128x1xf32>
    %31 = vector.shape_cast %30 : vector<1x128x1xf32> to vector<128x1xf32>
    %32 = vector.broadcast %31 : vector<128x1xf32> to vector<128x128xf32>
    %33 = arith.addf %29, %32 : vector<128x128xf32>
    %cst_20 = arith.constant 0.000000e+00 : f32
    %34 = vector.broadcast %cst_20 : f32 to vector<128x128xf32>
    %35 = arith.maximumf %33, %34 : vector<128x128xf32>
    %c2_21 = arith.constant 2 : index
    %c0_22 = arith.constant 0 : index
    %c0_23 = arith.constant 0 : index
    %36 = vector.load %arg3[%c2_21, %c0_22, %c0_23] : memref<4x128x128xbf16, #tpu.memory_space<vmem>>, vector<1x128x128xbf16>
    %37 = vector.shape_cast %36 : vector<1x128x128xbf16> to vector<128x128xbf16>
    %38 = arith.truncf %35 : vector<128x128xf32> to vector<128x128xbf16>
    %cst_24 = arith.constant dense<0.000000e+00> : vector<128x128xf32>
    %39 = tpu.matmul %37, %38, %cst_24 {dimension_numbers = #tpu.dot_dimension_numbers<[1], [0], [0], [1], [0, 0, 1, 1], [], []>} : vector<128x128xbf16>, vector<128x128xbf16>, vector<128x128xf32> -> vector<128x128xf32>
    %c2_25 = arith.constant 2 : index
    %c0_26 = arith.constant 0 : index
    %c0_27 = arith.constant 0 : index
    %40 = vector.load %arg4[%c2_25, %c0_26, %c0_27] : memref<4x128x1xf32, #tpu.memory_space<vmem>>, vector<1x128x1xf32>
    %41 = vector.shape_cast %40 : vector<1x128x1xf32> to vector<128x1xf32>
    %42 = vector.broadcast %41 : vector<128x1xf32> to vector<128x128xf32>
    %43 = arith.addf %39, %42 : vector<128x128xf32>
    %cst_28 = arith.constant 0.000000e+00 : f32
    %44 = vector.broadcast %cst_28 : f32 to vector<128x128xf32>
    %45 = arith.maximumf %43, %44 : vector<128x128xf32>
    %c3 = arith.constant 3 : index
    %c0_29 = arith.constant 0 : index
    %c0_30 = arith.constant 0 : index
    %46 = vector.load %arg3[%c3, %c0_29, %c0_30] : memref<4x128x128xbf16, #tpu.memory_space<vmem>>, vector<1x128x128xbf16>
    %47 = vector.shape_cast %46 : vector<1x128x128xbf16> to vector<128x128xbf16>
    %48 = arith.truncf %45 : vector<128x128xf32> to vector<128x128xbf16>
    %cst_31 = arith.constant dense<0.000000e+00> : vector<128x128xf32>
    %49 = tpu.matmul %47, %48, %cst_31 {dimension_numbers = #tpu.dot_dimension_numbers<[1], [0], [0], [1], [0, 0, 1, 1], [], []>} : vector<128x128xbf16>, vector<128x128xbf16>, vector<128x128xf32> -> vector<128x128xf32>
    %c3_32 = arith.constant 3 : index
    %c0_33 = arith.constant 0 : index
    %c0_34 = arith.constant 0 : index
    %50 = vector.load %arg4[%c3_32, %c0_33, %c0_34] : memref<4x128x1xf32, #tpu.memory_space<vmem>>, vector<1x128x1xf32>
    %51 = vector.shape_cast %50 : vector<1x128x1xf32> to vector<128x1xf32>
    %52 = vector.broadcast %51 : vector<128x1xf32> to vector<128x128xf32>
    %53 = arith.addf %49, %52 : vector<128x128xf32>
    %cst_35 = arith.constant 0.000000e+00 : f32
    %54 = vector.broadcast %cst_35 : f32 to vector<128x128xf32>
    %55 = arith.maximumf %53, %54 : vector<128x128xf32>
    %c0_36 = arith.constant 0 : index
    %c0_37 = arith.constant 0 : index
    %56 = vector.load %arg5[%c0_36, %c0_37] : memref<3x128xbf16, #tpu.memory_space<vmem>>, vector<3x128xbf16>
    %57 = arith.truncf %55 : vector<128x128xf32> to vector<128x128xbf16>
    %cst_38 = arith.constant dense<0.000000e+00> : vector<3x128xf32>
    %58 = tpu.matmul %56, %57, %cst_38 {dimension_numbers = #tpu.dot_dimension_numbers<[1], [0], [0], [1], [0, 0, 1, 1], [], []>} : vector<3x128xbf16>, vector<128x128xbf16>, vector<3x128xf32> -> vector<3x128xf32>
    %c0_39 = arith.constant 0 : index
    %c0_40 = arith.constant 0 : index
    %59 = vector.load %arg6[%c0_39, %c0_40] : memref<3x128xf32, #tpu.memory_space<vmem>>, vector<3x128xf32>
    tpu.vector_store %arg6[%c0_39, %c0_40], %58 {strides = array<i32>} : memref<3x128xf32, #tpu.memory_space<vmem>>, vector<3x128xf32>,
    return
  }
  func.func @transform_0(%arg0: i32) -> (i32, i32) {
    %c0_i32 = arith.constant 0 : i32
    %c0_i32_0 = arith.constant 0 : i32
    return %c0_i32, %arg0 : i32, i32
  }
  func.func @transform_1(%arg0: i32) -> (i32, i32) {
    %c0_i32 = arith.constant 0 : i32
    %c0_i32_0 = arith.constant 0 : i32
    %c0_i32_1 = arith.constant 0 : i32
    return %c0_i32, %c0_i32_0 : i32, i32
  }
  func.func @transform_2(%arg0: i32) -> (i32, i32, i32) {
    %c0_i32 = arith.constant 0 : i32
    %c0_i32_0 = arith.constant 0 : i32
    %c0_i32_1 = arith.constant 0 : i32
    %c0_i32_2 = arith.constant 0 : i32
    return %c0_i32, %c0_i32_0, %c0_i32_1 : i32, i32, i32
  }
  func.func @transform_3(%arg0: i32) -> (i32, i32, i32) {
    %c0_i32 = arith.constant 0 : i32
    %c0_i32_0 = arith.constant 0 : i32
    %c0_i32_1 = arith.constant 0 : i32
    %c0_i32_2 = arith.constant 0 : i32
    return %c0_i32, %c0_i32_0, %c0_i32_1 : i32, i32, i32
  }
  func.func @transform_4(%arg0: i32) -> (i32, i32) {
    %c0_i32 = arith.constant 0 : i32
    %c0_i32_0 = arith.constant 0 : i32
    %c0_i32_1 = arith.constant 0 : i32
    return %c0_i32, %c0_i32_0 : i32, i32
  }
  func.func @transform_5(%arg0: i32) -> (i32, i32) {
    %c0_i32 = arith.constant 0 : i32
    %c0_i32_0 = arith.constant 0 : i32
    return %c0_i32, %arg0 : i32, i32
  }
}

</mosaic_0001>

<llo_original>
// kernel: squeeze.5
$region0: #{squeeze.5}
  %s0 = inlined_call_operand.vmem [shape: f32[16], index: 0, kind: input, shape index: {}]
  %s1 = inlined_call_operand.hbm [shape: f32[2,8,1], index: 1, kind: output, shape index: {}]
  $region1: #{squeeze.5} parent=0
    #allocation0 [shape = 'u8[1024]{0}', space=vmem, size = 0x400, scoped, tag = 'operand span for operand 1']
    #allocation1 [shape = 's32[1]{0}', space=sflag, size = 0x4, scoped, tag = 'scoped memory for squeeze.5']
    #allocation2 [shape = 'u8[4096]{0}', space=vmem, size = 0x1000, scoped, tag = 'scoped mem for output reshape']
    #allocation3 [shape = 'u8[4096]{0}', space=vmem, size = 0x1000, scoped, tag = 'scoped mem for input reshape']
    %2 = vsyncpa [#allocation1], 0
    %s4 = sshllo.u32 0, 1
    %v5 = vld [vmem:[%s0] sm:%s4]
    %6 = vst [vmem:[#allocation3] sm:%s4] %v5
    %v7 = vld [vmem:[#allocation3] sm:$0x1]
    %vm8 = vcmask 64512
    %9 = vst.msk [vmem:[#allocation2] sm:$0x1] %vm8, %v7
    %v10 = vld [vmem:[#allocation3] sm:$0x1]
    %11 = vrot.lane.b32.xlu0 %v10, 120
    %v12 = vpop.permute.xlu0 %11
    %vm13 = vcmask 64512
    %s14 = scalar_lea.vmem [#allocation2], 1
    %15 = vst.msk [vmem:[%s14] sm:$0x1] %vm13, %v12
    %s17 = sshllo.u32 0, 2
    %v19 = vld [vmem:[#allocation2] sm:%s17]
    %s20 = sshllo.u32 0, 2
    %21 = vst [vmem:[#allocation0] sm:%s20] %v19
    %s23 = ssub.s32 32, 32
    %24 = vsyncadd [#allocation1], %s23
    %s26 = sshll.u32 [#allocation0], 4
    %s27 = int_to_ptr.vmem [resolvable:$true] %s26
    %29 = dma.vmem_to_hbm [thread:$0]  %s27, 32, %s1, [#allocation1]
    %30 = dma.done [#allocation1], 32
    %31 = vsyncpa [#allocation1], 1

// kernel: quadratic_head_forward.1
$region0: #{quadratic_head_forward.1}
  #allocation0 [shape = 'u32[]', space=smem, size = 0x4, offset = 0x4, fixed_abs, tag = 'smem constant byte address 0x4 - core index']
  #allocation1 [shape = 'u32[144,128]{1,0:T(1,128)}', space=vmem, size = 0x12000, scoped, tag = 'internal scratch']
  %s0 = inlined_call_operand.vmem [shape: f32[1,128], index: 0, kind: input, shape index: {}]
  %s1 = inlined_call_operand.vmem [shape: f32[128,8], index: 1, kind: input, shape index: {}]
  %s2 = inlined_call_operand.vmem [shape: bf16[4,128,128], index: 2, kind: input, shape index: {}]
  %s3 = inlined_call_operand.vmem [shape: f32[4,128,1], index: 3, kind: input, shape index: {}]
  %s4 = inlined_call_operand.vmem [shape: bf16[3,128], index: 4, kind: input, shape index: {}]
  %s5 = inlined_call_operand.vmem [shape: f32[3,128], index: 5, kind: output, shape index: {}]
  %s6 = sld [smem:[#allocation0]]
  $region30: #{quadratic_head_forward.1} parent=0
    _
  %s8 = ssub.s32 1, %s6
  %s9 = scalar_select 0, %s8, %s6
  // Predicated region
  $region2: #{quadratic_head_forward.1} parent=0 // pred_check
    _
  $region3: #{quadratic_head_forward.1} parent=0 // pred_check_branch
    %11 = sbr.rel (0) target = $region5
  $region4: #{quadratic_head_forward.1} parent=0 // pred_region
    _
  $region5: #{quadratic_head_forward.1} parent=0 // pred_fallthru
    _
  // Predicated region
  $region6: #{quadratic_head_forward.1} parent=0 // pred_check
    _
  $region7: #{quadratic_head_forward.1} parent=0 // pred_check_branch
    %13 = sbr.rel (0) target = $region9
  $region8: #{quadratic_head_forward.1} parent=0 // pred_region
    _
  $region9: #{quadratic_head_forward.1} parent=0 // pred_fallthru
    _
  // Predicated region
  $region10: #{quadratic_head_forward.1} parent=0 // pred_check
    _
  $region11: #{quadratic_head_forward.1} parent=0 // pred_check_branch
    %15 = sbr.rel (0) target = $region13
  $region12: #{quadratic_head_forward.1} parent=0 // pred_region
    _
  $region13: #{quadratic_head_forward.1} parent=0 // pred_fallthru
    _
  // Predicated region
  $region14: #{quadratic_head_forward.1} parent=0 // pred_check
    _
  $region15: #{quadratic_head_forward.1} parent=0 // pred_check_branch
    %17 = sbr.rel (0) target = $region17
  $region16: #{quadratic_head_forward.1} parent=0 // pred_region
    _
  $region17: #{quadratic_head_forward.1} parent=0 // pred_fallthru
    _
  // Predicated region
  $region18: #{quadratic_head_forward.1} parent=0 // pred_check
    _
  $region19: #{quadratic_head_forward.1} parent=0 // pred_check_branch
    %19 = sbr.rel (0) target = $region21
  $region20: #{quadratic_head_forward.1} parent=0 // pred_region
    _
  $region21: #{quadratic_head_forward.1} parent=0 // pred_fallthru
    _
  %v21 = vld [vmem:[%s0] sm:$0x1]
  %v22 = vmul.f32 %v21, %v21
  %v23 = vld [vmem:[%s1] sm:$0xff]
  %v24 = vld [vmem:[%s1 + $0x8] sm:$0xff]
  %v25 = vld [vmem:[%s1 + $0x10] sm:$0xff]
  %v26 = vld [vmem:[%s1 + $0x18] sm:$0xff]
  %v27 = vld [vmem:[%s1 + $0x20] sm:$0xff]
  %v28 = vld [vmem:[%s1 + $0x28] sm:$0xff]
  %v29 = vld [vmem:[%s1 + $0x30] sm:$0xff]
  %v30 = vld [vmem:[%s1 + $0x38] sm:$0xff]
  %v31 = vld [vmem:[%s1 + $0x40] sm:$0xff]
  %v32 = vld [vmem:[%s1 + $0x48] sm:$0xff]
  %v33 = vld [vmem:[%s1 + $0x50] sm:$0xff]
  %v34 = vld [vmem:[%s1 + $0x58] sm:$0xff]
  %v35 = vld [vmem:[%s1 + $0x60] sm:$0xff]
  %v36 = vld [vmem:[%s1 + $0x68] sm:$0xff]
  %v37 = vld [vmem:[%s1 + $0x70] sm:$0xff]
  %v38 = vld [vmem:[%s1 + $0x78] sm:$0xff]
  %40 = vset.pattern.permute.xlu0 0
  %41 = vperm.xlu0 %40, %v23
  %v42 = vpop.permute.xlu0 %41
  %45 = vset.pattern.permute.xlu0 0
  %46 = vperm.xlu0 %45, %v24
  %v47 = vpop.permute.xlu0 %46
  %50 = vset.pattern.permute.xlu0 0
  %51 = vperm.xlu0 %50, %v25
  %v52 = vpop.permute.xlu0 %51
  %55 = vset.pattern.permute.xlu0 0
  %56 = vperm.xlu0 %55, %v26
  %v57 = vpop.permute.xlu0 %56
  %60 = vset.pattern.permute.xlu0 0
  %61 = vperm.xlu0 %60, %v27
  %v62 = vpop.permute.xlu0 %61
  %65 = vset.pattern.permute.xlu0 0
  %66 = vperm.xlu0 %65, %v28
  %v67 = vpop.permute.xlu0 %66
  %70 = vset.pattern.permute.xlu0 0
  %71 = vperm.xlu0 %70, %v29
  %v72 = vpop.permute.xlu0 %71
  %75 = vset.pattern.permute.xlu0 0
  %76 = vperm.xlu0 %75, %v30
  %v77 = vpop.permute.xlu0 %76
  %80 = vset.pattern.permute.xlu0 0
  %81 = vperm.xlu0 %80, %v31
  %v82 = vpop.permute.xlu0 %81
  %85 = vset.pattern.permute.xlu0 0
  %86 = vperm.xlu0 %85, %v32
  %v87 = vpop.permute.xlu0 %86
  %90 = vset.pattern.permute.xlu0 0
  %91 = vperm.xlu0 %90, %v33
  %v92 = vpop.permute.xlu0 %91
  %95 = vset.pattern.permute.xlu0 0
  %96 = vperm.xlu0 %95, %v34
  %v97 = vpop.permute.xlu0 %96
  %100 = vset.pattern.permute.xlu0 0
  %101 = vperm.xlu0 %100, %v35
  %v102 = vpop.permute.xlu0 %101
  %105 = vset.pattern.permute.xlu0 0
  %106 = vperm.xlu0 %105, %v36
  %v107 = vpop.permute.xlu0 %106
  %110 = vset.pattern.permute.xlu0 0
  %111 = vperm.xlu0 %110, %v37
  %v112 = vpop.permute.xlu0 %111
  %115 = vset.pattern.permute.xlu0 0
  %116 = vperm.xlu0 %115, %v38
  %v117 = vpop.permute.xlu0 %116
  %v120 = vlaneseq
  %v121 = vshrl.u32 %v120, 7
  %v122 = vsub.s32 0, %v121
  %v123 = vrot.slane %v21, %v122
  %v125 = vmul.f32 %v42, %v123
  %v126 = vmul.f32 %v47, %v123
  %v127 = vmul.f32 %v52, %v123
  %v128 = vmul.f32 %v57, %v123
  %v129 = vmul.f32 %v62, %v123
  %v130 = vmul.f32 %v67, %v123
  %v131 = vmul.f32 %v72, %v123
  %v132 = vmul.f32 %v77, %v123
  %v133 = vmul.f32 %v82, %v123
  %v134 = vmul.f32 %v87, %v123
  %v135 = vmul.f32 %v92, %v123
  %v136 = vmul.f32 %v97, %v123
  %v137 = vmul.f32 %v102, %v123
  %v138 = vmul.f32 %v107, %v123
  %v139 = vmul.f32 %v112, %v123
  %v140 = vmul.f32 %v117, %v123
  %141 = vset.pattern.permute.xlu0 1
  %142 = vperm.xlu0 %141, %v23
  %v143 = vpop.permute.xlu0 %142
  %145 = vset.pattern.permute.xlu0 1
  %146 = vperm.xlu0 %145, %v24
  %v147 = vpop.permute.xlu0 %146
  %149 = vset.pattern.permute.xlu0 1
  %150 = vperm.xlu0 %149, %v25
  %v151 = vpop.permute.xlu0 %150
  %153 = vset.pattern.permute.xlu0 1
  %154 = vperm.xlu0 %153, %v26
  %v155 = vpop.permute.xlu0 %154
  %157 = vset.pattern.permute.xlu0 1
  %158 = vperm.xlu0 %157, %v27
  %v159 = vpop.permute.xlu0 %158
  %161 = vset.pattern.permute.xlu0 1
  %162 = vperm.xlu0 %161, %v28
  %v163 = vpop.permute.xlu0 %162
  %165 = vset.pattern.permute.xlu0 1
  %166 = vperm.xlu0 %165, %v29
  %v167 = vpop.permute.xlu0 %166
  %169 = vset.pattern.permute.xlu0 1
  %170 = vperm.xlu0 %169, %v30
  %v171 = vpop.permute.xlu0 %170
  %173 = vset.pattern.permute.xlu0 1
  %174 = vperm.xlu0 %173, %v31
  %v175 = vpop.permute.xlu0 %174
  %177 = vset.pattern.permute.xlu0 1
  %178 = vperm.xlu0 %177, %v32
  %v179 = vpop.permute.xlu0 %178
  %181 = vset.pattern.permute.xlu0 1
  %182 = vperm.xlu0 %181, %v33
  %v183 = vpop.permute.xlu0 %182
  %185 = vset.pattern.permute.xlu0 1
  %186 = vperm.xlu0 %185, %v34
  %v187 = vpop.permute.xlu0 %186
  %189 = vset.pattern.permute.xlu0 1
  %190 = vperm.xlu0 %189, %v35
  %v191 = vpop.permute.xlu0 %190
  %193 = vset.pattern.permute.xlu0 1
  %194 = vperm.xlu0 %193, %v36
  %v195 = vpop.permute.xlu0 %194
  %197 = vset.pattern.permute.xlu0 1
  %198 = vperm.xlu0 %197, %v37
  %v199 = vpop.permute.xlu0 %198
  %201 = vset.pattern.permute.xlu0 1
  %202 = vperm.xlu0 %201, %v38
  %v203 = vpop.permute.xlu0 %202
  %v206 = vlaneseq
  %v207 = vshrl.u32 %v206, 7
  %v208 = vsub.s32 0, %v207
  %v209 = vrot.slane %v22, %v208
  %v211 = vmul.f32 %v143, %v209
  %v212 = vmul.f32 %v147, %v209
  %v213 = vmul.f32 %v151, %v209
  %v214 = vmul.f32 %v155, %v209
  %v215 = vmul.f32 %v159, %v209
  %v216 = vmul.f32 %v163, %v209
  %v217 = vmul.f32 %v167, %v209
  %v218 = vmul.f32 %v171, %v209
  %v219 = vmul.f32 %v175, %v209
  %v220 = vmul.f32 %v179, %v209
  %v221 = vmul.f32 %v183, %v209
  %v222 = vmul.f32 %v187, %v209
  %v223 = vmul.f32 %v191, %v209
  %v224 = vmul.f32 %v195, %v209
  %v225 = vmul.f32 %v199, %v209
  %v226 = vmul.f32 %v203, %v209
  %v227 = vadd.f32 %v125, %v211
  %v228 = vadd.f32 %v126, %v212
  %v229 = vadd.f32 %v127, %v213
  %v230 = vadd.f32 %v128, %v214
  %v231 = vadd.f32 %v129, %v215
  %v232 = vadd.f32 %v130, %v216
  %v233 = vadd.f32 %v131, %v217
  %v234 = vadd.f32 %v132, %v218
  %v235 = vadd.f32 %v133, %v219
  %v236 = vadd.f32 %v134, %v220
  %v237 = vadd.f32 %v135, %v221
  %v238 = vadd.f32 %v136, %v222
  %v239 = vadd.f32 %v137, %v223
  %v240 = vadd.f32 %v138, %v224
  %v241 = vadd.f32 %v139, %v225
  %v242 = vadd.f32 %v140, %v226
  %243 = vset.pattern.permute.xlu0 2
  %244 = vperm.xlu0 %243, %v23
  %v245 = vpop.permute.xlu0 %244
  %247 = vset.pattern.permute.xlu0 2
  %248 = vperm.xlu0 %247, %v24
  %v249 = vpop.permute.xlu0 %248
  %251 = vset.pattern.permute.xlu0 2
  %252 = vperm.xlu0 %251, %v25
  %v253 = vpop.permute.xlu0 %252
  %255 = vset.pattern.permute.xlu0 2
  %256 = vperm.xlu0 %255, %v26
  %v257 = vpop.permute.xlu0 %256
  %259 = vset.pattern.permute.xlu0 2
  %260 = vperm.xlu0 %259, %v27
  %v261 = vpop.permute.xlu0 %260
  %263 = vset.pattern.permute.xlu0 2
  %264 = vperm.xlu0 %263, %v28
  %v265 = vpop.permute.xlu0 %264
  %267 = vset.pattern.permute.xlu0 2
  %268 = vperm.xlu0 %267, %v29
  %v269 = vpop.permute.xlu0 %268
  %271 = vset.pattern.permute.xlu0 2
  %272 = vperm.xlu0 %271, %v30
  %v273 = vpop.permute.xlu0 %272
  %275 = vset.pattern.permute.xlu0 2
  %276 = vperm.xlu0 %275, %v31
  %v277 = vpop.permute.xlu0 %276
  %279 = vset.pattern.permute.xlu0 2
  %280 = vperm.xlu0 %279, %v32
  %v281 = vpop.permute.xlu0 %280
  %283 = vset.pattern.permute.xlu0 2
  %284 = vperm.xlu0 %283, %v33
  %v285 = vpop.permute.xlu0 %284
  %287 = vset.pattern.permute.xlu0 2
  %288 = vperm.xlu0 %287, %v34
  %v289 = vpop.permute.xlu0 %288
  %291 = vset.pattern.permute.xlu0 2
  %292 = vperm.xlu0 %291, %v35
  %v293 = vpop.permute.xlu0 %292
  %295 = vset.pattern.permute.xlu0 2
  %296 = vperm.xlu0 %295, %v36
  %v297 = vpop.permute.xlu0 %296
  %299 = vset.pattern.permute.xlu0 2
  %300 = vperm.xlu0 %299, %v37
  %v301 = vpop.permute.xlu0 %300
  %303 = vset.pattern.permute.xlu0 2
  %304 = vperm.xlu0 %303, %v38
  %v305 = vpop.permute.xlu0 %304
  %v307 = vadd.f32 %v227, %v245
  %v308 = vadd.f32 %v228, %v249
  %v309 = vadd.f32 %v229, %v253
  %v310 = vadd.f32 %v230, %v257
  %v311 = vadd.f32 %v231, %v261
  %v312 = vadd.f32 %v232, %v265
  %v313 = vadd.f32 %v233, %v269
  %v314 = vadd.f32 %v234, %v273
  %v315 = vadd.f32 %v235, %v277
  %v316 = vadd.f32 %v236, %v281
  %v317 = vadd.f32 %v237, %v285
  %v318 = vadd.f32 %v238, %v289
  %v319 = vadd.f32 %v239, %v293
  %v320 = vadd.f32 %v240, %v297
  %v321 = vadd.f32 %v241, %v301
  %v322 = vadd.f32 %v242, %v305
  %v323 = vmax.f32 %v307, 0.0
  %v324 = vmax.f32 %v308, 0.0
  %v325 = vmax.f32 %v309, 0.0
  %v326 = vmax.f32 %v310, 0.0
  %v327 = vmax.f32 %v311, 0.0
  %v328 = vmax.f32 %v312, 0.0
  %v329 = vmax.f32 %v313, 0.0
  %v330 = vmax.f32 %v314, 0.0
  %v331 = vmax.f32 %v315, 0.0
  %v332 = vmax.f32 %v316, 0.0
  %v333 = vmax.f32 %v317, 0.0
  %v334 = vmax.f32 %v318, 0.0
  %v335 = vmax.f32 %v319, 0.0
  %v336 = vmax.f32 %v320, 0.0
  %v337 = vmax.f32 %v321, 0.0
  %v338 = vmax.f32 %v322, 0.0
  %v339 = vld [vmem:[%s2] sm:$0xf]
  %v340 = vld [vmem:[%s2 + $0x4] sm:$0xf]
  %v341 = vld [vmem:[%s2 + $0x8] sm:$0xf]
  %v342 = vld [vmem:[%s2 + $0xc] sm:$0xf]
  %v343 = vld [vmem:[%s2 + $0x10] sm:$0xf]
  %v344 = vld [vmem:[%s2 + $0x14] sm:$0xf]
  %v345 = vld [vmem:[%s2 + $0x18] sm:$0xf]
  %v346 = vld [vmem:[%s2 + $0x1c] sm:$0xf]
  %v347 = vld [vmem:[%s2 + $0x20] sm:$0xf]
  %v348 = vld [vmem:[%s2 + $0x24] sm:$0xf]
  %v349 = vld [vmem:[%s2 + $0x28] sm:$0xf]
  %v350 = vld [vmem:[%s2 + $0x2c] sm:$0xf]
  %v351 = vld [vmem:[%s2 + $0x30] sm:$0xf]
  %v352 = vld [vmem:[%s2 + $0x34] sm:$0xf]
  %v353 = vld [vmem:[%s2 + $0x38] sm:$0xf]
  %v354 = vld [vmem:[%s2 + $0x3c] sm:$0xf]
  %v355 = vpack.c.bf16 %v324, %v323
  %v356 = vpack.c.bf16 %v326, %v325
  %v357 = vpack.c.bf16 %v328, %v327
  %v358 = vpack.c.bf16 %v330, %v329
  %v359 = vpack.c.bf16 %v332, %v331
  %v360 = vpack.c.bf16 %v334, %v333
  %v361 = vpack.c.bf16 %v336, %v335
  %v362 = vpack.c.bf16 %v338, %v337
  %v363 = vld [vmem:[%s3] sm:$0xff]
  %v364 = vld [vmem:[%s3 + $0x8] sm:$0xff]
  %v365 = vld [vmem:[%s3 + $0x10] sm:$0xff]
  %v366 = vld [vmem:[%s3 + $0x18] sm:$0xff]
  %v367 = vld [vmem:[%s3 + $0x20] sm:$0xff]
  %v368 = vld [vmem:[%s3 + $0x28] sm:$0xff]
  %v369 = vld [vmem:[%s3 + $0x30] sm:$0xff]
  %v370 = vld [vmem:[%s3 + $0x38] sm:$0xff]
  %v371 = vld [vmem:[%s3 + $0x40] sm:$0xff]
  %v372 = vld [vmem:[%s3 + $0x48] sm:$0xff]
  %v373 = vld [vmem:[%s3 + $0x50] sm:$0xff]
  %v374 = vld [vmem:[%s3 + $0x58] sm:$0xff]
  %v375 = vld [vmem:[%s3 + $0x60] sm:$0xff]
  %v376 = vld [vmem:[%s3 + $0x68] sm:$0xff]
  %v377 = vld [vmem:[%s3 + $0x70] sm:$0xff]
  %v378 = vld [vmem:[%s3 + $0x78] sm:$0xff]
  %380 = vset.pattern.permute.xlu0 0
  %381 = vperm.xlu0 %380, %v363
  %v382 = vpop.permute.xlu0 %381
  %385 = vset.pattern.permute.xlu0 0
  %386 = vperm.xlu0 %385, %v364
  %v387 = vpop.permute.xlu0 %386
  %390 = vset.pattern.permute.xlu0 0
  %391 = vperm.xlu0 %390, %v365
  %v392 = vpop.permute.xlu0 %391
  %395 = vset.pattern.permute.xlu0 0
  %396 = vperm.xlu0 %395, %v366
  %v397 = vpop.permute.xlu0 %396
  %400 = vset.pattern.permute.xlu0 0
  %401 = vperm.xlu0 %400, %v367
  %v402 = vpop.permute.xlu0 %401
  %405 = vset.pattern.permute.xlu0 0
  %406 = vperm.xlu0 %405, %v368
  %v407 = vpop.permute.xlu0 %406
  %410 = vset.pattern.permute.xlu0 0
  %411 = vperm.xlu0 %410, %v369
  %v412 = vpop.permute.xlu0 %411
  %415 = vset.pattern.permute.xlu0 0
  %416 = vperm.xlu0 %415, %v370
  %v417 = vpop.permute.xlu0 %416
  %420 = vset.pattern.permute.xlu0 0
  %421 = vperm.xlu0 %420, %v371
  %v422 = vpop.permute.xlu0 %421
  %425 = vset.pattern.permute.xlu0 0
  %426 = vperm.xlu0 %425, %v372
  %v427 = vpop.permute.xlu0 %426
  %430 = vset.pattern.permute.xlu0 0
  %431 = vperm.xlu0 %430, %v373
  %v432 = vpop.permute.xlu0 %431
  %435 = vset.pattern.permute.xlu0 0
  %436 = vperm.xlu0 %435, %v374
  %v437 = vpop.permute.xlu0 %436
  %440 = vset.pattern.permute.xlu0 0
  %441 = vperm.xlu0 %440, %v375
  %v442 = vpop.permute.xlu0 %441
  %445 = vset.pattern.permute.xlu0 0
  %446 = vperm.xlu0 %445, %v376
  %v447 = vpop.permute.xlu0 %446
  %450 = vset.pattern.permute.xlu0 0
  %451 = vperm.xlu0 %450, %v377
  %v452 = vpop.permute.xlu0 %451
  %455 = vset.pattern.permute.xlu0 0
  %456 = vperm.xlu0 %455, %v378
  %v457 = vpop.permute.xlu0 %456
  %v475 = vunpack.c.l.b16 %v339
  %v476 = vunpack.c.l.b16 %v340
  %v477 = vunpack.c.l.b16 %v341
  %v478 = vunpack.c.l.b16 %v342
  %v479 = vunpack.c.l.b16 %v343
  %v480 = vunpack.c.l.b16 %v344
  %v481 = vunpack.c.l.b16 %v345
  %v482 = vunpack.c.l.b16 %v346
  %v483 = vunpack.c.l.b16 %v347
  %v484 = vunpack.c.l.b16 %v348
  %v485 = vunpack.c.l.b16 %v349
  %v486 = vunpack.c.l.b16 %v350
  %v487 = vunpack.c.l.b16 %v351
  %v488 = vunpack.c.l.b16 %v352
  %v489 = vunpack.c.l.b16 %v353
  %v490 = vunpack.c.l.b16 %v354
  %v491 = vpack.c.b16 %v476, %v475
  %v492 = vpack.c.b16 %v478, %v477
  %v493 = vpack.c.b16 %v480, %v479
  %v494 = vpack.c.b16 %v482, %v481
  %v495 = vpack.c.b16 %v484, %v483
  %v496 = vpack.c.b16 %v486, %v485
  %v497 = vpack.c.b16 %v488, %v487
  %v498 = vpack.c.b16 %v490, %v489
  %507 = vmatprep.subr.bf16.mxu0 0
  %508 = vmatpush1.bf16.msra.mxu0 %v355
  %509 = vmatprep.subr.bf16.mxu0 0
  %510 = vmatpush1.bf16.msra.mxu0 %v356
  %511 = vmatprep.subr.bf16.mxu0 0
  %512 = vmatpush1.bf16.msra.mxu0 %v357
  %513 = vmatprep.subr.bf16.mxu0 0
  %514 = vmatpush1.bf16.msra.mxu0 %v358
  %515 = vmatprep.subr.bf16.mxu0 0
  %516 = vmatpush1.bf16.msra.mxu0 %v359
  %517 = vmatprep.subr.bf16.mxu0 0
  %518 = vmatpush1.bf16.msra.mxu0 %v360
  %519 = vmatprep.subr.bf16.mxu0 0
  %520 = vmatpush1.bf16.msra.mxu0 %v361
  %521 = vmatprep.subr.bf16.mxu0 0
  %522 = vmatpush1.bf16.msra.mxu0 %v362
  %523 = vmatprep.subr.bf16.mxu0 0
  %524 = vmatpush1.bf16.msra.mxu0 0
  %525 = vmatprep.subr.bf16.mxu0 0
  %526 = vmatpush1.bf16.msra.mxu0 0
  %527 = vmatprep.subr.bf16.mxu0 0
  %528 = vmatpush1.bf16.msra.mxu0 0
  %529 = vmatprep.subr.bf16.mxu0 0
  %530 = vmatpush1.bf16.msra.mxu0 0
  %531 = vmatprep.subr.bf16.mxu0 0
  %532 = vmatpush1.bf16.msra.mxu0 0
  %533 = vmatprep.subr.bf16.mxu0 0
  %534 = vmatpush1.bf16.msra.mxu0 0
  %535 = vmatprep.subr.bf16.mxu0 0
  %536 = vmatpush1.bf16.msra.mxu0 0
  %537 = vmatprep.subr.bf16.mxu0 0
  %538 = vmatpush1.bf16.msra.mxu0 0
  %539 = vmatprep.mubr.bf16.mxu0 0
  %540 = vmatmul.mubr.bf16.gmra.mrb[0].mxu0 %v491
  %v541 = vpop.f32.mrb[0].mxu0
  %v542 = vadd.f32 %v382, %v541
  %v543 = vpop.f32.mrb[0].mxu0
  %v544 = vpop.f32.mrb[0].mxu0
  %v545 = vadd.f32 %v387, %v544
  %v546 = vpop.f32.mrb[0].mxu0
  %547 = vmatprep.mubr.bf16.mxu0 0
  %548 = vmatmul.mubr.bf16.gmra.mrb[0].mxu0 %v492
  %v549 = vpop.f32.mrb[0].mxu0
  %v550 = vadd.f32 %v392, %v549
  %v551 = vpop.f32.mrb[0].mxu0
  %v552 = vpop.f32.mrb[0].mxu0
  %v553 = vadd.f32 %v397, %v552
  %v554 = vpop.f32.mrb[0].mxu0
  %555 = vmatprep.mubr.bf16.mxu0 0
  %556 = vmatmul.mubr.bf16.gmra.mrb[0].mxu0 %v493
  %v557 = vpop.f32.mrb[0].mxu0
  %v558 = vadd.f32 %v402, %v557
  %v559 = vpop.f32.mrb[0].mxu0
  %v560 = vpop.f32.mrb[0].mxu0
  %v561 = vadd.f32 %v407, %v560
  %v562 = vpop.f32.mrb[0].mxu0
  %563 = vmatprep.mubr.bf16.mxu0 0
  %564 = vmatmul.mubr.bf16.gmra.mrb[0].mxu0 %v494
  %v565 = vpop.f32.mrb[0].mxu0
  %v566 = vadd.f32 %v412, %v565
  %v567 = vpop.f32.mrb[0].mxu0
  %v568 = vpop.f32.mrb[0].mxu0
  %v569 = vadd.f32 %v417, %v568
  %v570 = vpop.f32.mrb[0].mxu0
  %571 = vmatprep.mubr.bf16.mxu0 0
  %572 = vmatmul.mubr.bf16.gmra.mrb[0].mxu0 %v495
  %v573 = vpop.f32.mrb[0].mxu0
  %v574 = vadd.f32 %v422, %v573
  %v575 = vpop.f32.mrb[0].mxu0
  %v576 = vpop.f32.mrb[0].mxu0
  %v577 = vadd.f32 %v427, %v576
  %v578 = vpop.f32.mrb[0].mxu0
  %579 = vmatprep.mubr.bf16.mxu0 0
  %580 = vmatmul.mubr.bf16.gmra.mrb[0].mxu0 %v496
  %v581 = vpop.f32.mrb[0].mxu0
  %v582 = vadd.f32 %v432, %v581
  %v583 = vpop.f32.mrb[0].mxu0
  %v584 = vpop.f32.mrb[0].mxu0
  %v585 = vadd.f32 %v437, %v584
  %v586 = vpop.f32.mrb[0].mxu0
  %587 = vmatprep.mubr.bf16.mxu0 0
  %588 = vmatmul.mubr.bf16.gmra.mrb[0].mxu0 %v497
  %v589 = vpop.f32.mrb[0].mxu0
  %v590 = vadd.f32 %v442, %v589
  %v591 = vpop.f32.mrb[0].mxu0
  %v592 = vpop.f32.mrb[0].mxu0
  %v593 = vadd.f32 %v447, %v592
  %v594 = vpop.f32.mrb[0].mxu0
  %595 = vmatprep.mubr.bf16.mxu0 0
  %596 = vmatmul.mubr.bf16.gmra.mrb[0].mxu0 %v498
  %v597 = vpop.f32.mrb[0].mxu0
  %v598 = vadd.f32 %v452, %v597
  %v599 = vpop.f32.mrb[0].mxu0
  %v600 = vpop.f32.mrb[0].mxu0
  %v601 = vadd.f32 %v457, %v600
  %v602 = vpop.f32.mrb[0].mxu0
  %603 = vdwg.mxu0
  %v604 = vmax.f32 %v542, 0.0
  %v605 = vmax.f32 %v545, 0.0
  %v606 = vmax.f32 %v550, 0.0
  %v607 = vmax.f32 %v553, 0.0
  %v608 = vmax.f32 %v558, 0.0
  %v609 = vmax.f32 %v561, 0.0
  %v610 = vmax.f32 %v566, 0.0
  %v611 = vmax.f32 %v569, 0.0
  %v612 = vmax.f32 %v574, 0.0
  %v613 = vmax.f32 %v577, 0.0
  %v614 = vmax.f32 %v582, 0.0
  %v615 = vmax.f32 %v585, 0.0
  %v616 = vmax.f32 %v590, 0.0
  %v617 = vmax.f32 %v593, 0.0
  %v618 = vmax.f32 %v598, 0.0
  %v619 = vmax.f32 %v601, 0.0
  %s620 = scalar_lea.vmem %s2, 64
  %v621 = vld [vmem:[%s620] sm:$0xf]
  %v622 = vld [vmem:[%s620 + $0x4] sm:$0xf]
  %v623 = vld [vmem:[%s620 + $0x8] sm:$0xf]
  %v624 = vld [vmem:[%s620 + $0xc] sm:$0xf]
  %v625 = vld [vmem:[%s620 + $0x10] sm:$0xf]
  %v626 = vld [vmem:[%s620 + $0x14] sm:$0xf]
  %v627 = vld [vmem:[%s620 + $0x18] sm:$0xf]
  %v628 = vld [vmem:[%s620 + $0x1c] sm:$0xf]
  %v629 = vld [vmem:[%s620 + $0x20] sm:$0xf]
  %v630 = vld [vmem:[%s620 + $0x24] sm:$0xf]
  %v631 = vld [vmem:[%s620 + $0x28] sm:$0xf]
  %v632 = vld [vmem:[%s620 + $0x2c] sm:$0xf]
  %v633 = vld [vmem:[%s620 + $0x30] sm:$0xf]
  %v634 = vld [vmem:[%s620 + $0x34] sm:$0xf]
  %v635 = vld [vmem:[%s620 + $0x38] sm:$0xf]
  %v636 = vld [vmem:[%s620 + $0x3c] sm:$0xf]
  %v637 = vpack.c.bf16 %v605, %v604
  %v638 = vpack.c.bf16 %v607, %v606
  %v639 = vpack.c.bf16 %v609, %v608
  %v640 = vpack.c.bf16 %v611, %v610
  %v641 = vpack.c.bf16 %v613, %v612
  %v642 = vpack.c.bf16 %v615, %v614
  %v643 = vpack.c.bf16 %v617, %v616
  %v644 = vpack.c.bf16 %v619, %v618
  %s645 = scalar_lea.vmem %s3, 128
  %v646 = vld [vmem:[%s645] sm:$0xff]
  %v647 = vld [vmem:[%s645 + $0x8] sm:$0xff]
  %v648 = vld [vmem:[%s645 + $0x10] sm:$0xff]
  %v649 = vld [vmem:[%s645 + $0x18] sm:$0xff]
  %v650 = vld [vmem:[%s645 + $0x20] sm:$0xff]
  %v651 = vld [vmem:[%s645 + $0x28] sm:$0xff]
  %v652 = vld [vmem:[%s645 + $0x30] sm:$0xff]
  %v653 = vld [vmem:[%s645 + $0x38] sm:$0xff]
  %v654 = vld [vmem:[%s645 + $0x40] sm:$0xff]
  %v655 = vld [vmem:[%s645 + $0x48] sm:$0xff]
  %v656 = vld [vmem:[%s645 + $0x50] sm:$0xff]
  %v657 = vld [vmem:[%s645 + $0x58] sm:$0xff]
  %v658 = vld [vmem:[%s645 + $0x60] sm:$0xff]
  %v659 = vld [vmem:[%s645 + $0x68] sm:$0xff]
  %v660 = vld [vmem:[%s645 + $0x70] sm:$0xff]
  %v661 = vld [vmem:[%s645 + $0x78] sm:$0xff]
  %663 = vset.pattern.permute.xlu0 0
  %664 = vperm.xlu0 %663, %v646
  %v665 = vpop.permute.xlu0 %664
  %668 = vset.pattern.permute.xlu0 0
  %669 = vperm.xlu0 %668, %v647
  %v670 = vpop.permute.xlu0 %669
  %673 = vset.pattern.permute.xlu0 0
  %674 = vperm.xlu0 %673, %v648
  %v675 = vpop.permute.xlu0 %674
  %678 = vset.pattern.permute.xlu0 0
  %679 = vperm.xlu0 %678, %v649
  %v680 = vpop.permute.xlu0 %679
  %683 = vset.pattern.permute.xlu0 0
  %684 = vperm.xlu0 %683, %v650
  %v685 = vpop.permute.xlu0 %684
  %688 = vset.pattern.permute.xlu0 0
  %689 = vperm.xlu0 %688, %v651
  %v690 = vpop.permute.xlu0 %689
  %693 = vset.pattern.permute.xlu0 0
  %694 = vperm.xlu0 %693, %v652
  %v695 = vpop.permute.xlu0 %694
  %698 = vset.pattern.permute.xlu0 0
  %699 = vperm.xlu0 %698, %v653
  %v700 = vpop.permute.xlu0 %699
  %703 = vset.pattern.permute.xlu0 0
  %704 = vperm.xlu0 %703, %v654
  %v705 = vpop.permute.xlu0 %704
  %708 = vset.pattern.permute.xlu0 0
  %709 = vperm.xlu0 %708, %v655
  %v710 = vpop.permute.xlu0 %709
  %713 = vset.pattern.permute.xlu0 0
  %714 = vperm.xlu0 %713, %v656
  %v715 = vpop.permute.xlu0 %714
  %718 = vset.pattern.permute.xlu0 0
  %719 = vperm.xlu0 %718, %v657
  %v720 = vpop.permute.xlu0 %719
  %723 = vset.pattern.permute.xlu0 0
  %724 = vperm.xlu0 %723, %v658
  %v725 = vpop.permute.xlu0 %724
  %728 = vset.pattern.permute.xlu0 0
  %729 = vperm.xlu0 %728, %v659
  %v730 = vpop.permute.xlu0 %729
  %733 = vset.pattern.permute.xlu0 0
  %734 = vperm.xlu0 %733, %v660
  %v735 = vpop.permute.xlu0 %734
  %738 = vset.pattern.permute.xlu0 0
  %739 = vperm.xlu0 %738, %v661
  %v740 = vpop.permute.xlu0 %739
  %v758 = vunpack.c.l.b16 %v621
  %v759 = vunpack.c.l.b16 %v622
  %v760 = vunpack.c.l.b16 %v623
  %v761 = vunpack.c.l.b16 %v624
  %v762 = vunpack.c.l.b16 %v625
  %v763 = vunpack.c.l.b16 %v626
  %v764 = vunpack.c.l.b16 %v627
  %v765 = vunpack.c.l.b16 %v628
  %v766 = vunpack.c.l.b16 %v629
  %v767 = vunpack.c.l.b16 %v630
  %v768 = vunpack.c.l.b16 %v631
  %v769 = vunpack.c.l.b16 %v632
  %v770 = vunpack.c.l.b16 %v633
  %v771 = vunpack.c.l.b16 %v634
  %v772 = vunpack.c.l.b16 %v635
  %v773 = vunpack.c.l.b16 %v636
  %v774 = vpack.c.b16 %v759, %v758
  %v775 = vpack.c.b16 %v761, %v760
  %v776 = vpack.c.b16 %v763, %v762
  %v777 = vpack.c.b16 %v765, %v764
  %v778 = vpack.c.b16 %v767, %v766
  %v779 = vpack.c.b16 %v769, %v768
  %v780 = vpack.c.b16 %v771, %v770
  %v781 = vpack.c.b16 %v773, %v772
  %790 = vmatprep.subr.bf16.mxu0 0
  %791 = vmatpush1.bf16.msra.mxu0 %v637
  %792 = vmatprep.subr.bf16.mxu0 0
  %793 = vmatpush1.bf16.msra.mxu0 %v638
  %794 = vmatprep.subr.bf16.mxu0 0
  %795 = vmatpush1.bf16.msra.mxu0 %v639
  %796 = vmatprep.subr.bf16.mxu0 0
  %797 = vmatpush1.bf16.msra.mxu0 %v640
  %798 = vmatprep.subr.bf16.mxu0 0
  %799 = vmatpush1.bf16.msra.mxu0 %v641
  %800 = vmatprep.subr.bf16.mxu0 0
  %801 = vmatpush1.bf16.msra.mxu0 %v642
  %802 = vmatprep.subr.bf16.mxu0 0
  %803 = vmatpush1.bf16.msra.mxu0 %v643
  %804 = vmatprep.subr.bf16.mxu0 0
  %805 = vmatpush1.bf16.msra.mxu0 %v644
  %806 = vmatprep.subr.bf16.mxu0 0
  %807 = vmatpush1.bf16.msra.mxu0 0
  %808 = vmatprep.subr.bf16.mxu0 0
  %809 = vmatpush1.bf16.msra.mxu0 0
  %810 = vmatprep.subr.bf16.mxu0 0
  %811 = vmatpush1.bf16.msra.mxu0 0
  %812 = vmatprep.subr.bf16.mxu0 0
  %813 = vmatpush1.bf16.msra.mxu0 0
  %814 = vmatprep.subr.bf16.mxu0 0
  %815 = vmatpush1.bf16.msra.mxu0 0
  %816 = vmatprep.subr.bf16.mxu0 0
  %817 = vmatpush1.bf16.msra.mxu0 0
  %818 = vmatprep.subr.bf16.mxu0 0
  %819 = vmatpush1.bf16.msra.mxu0 0
  %820 = vmatprep.subr.bf16.mxu0 0
  %821 = vmatpush1.bf16.msra.mxu0 0
  %822 = vmatprep.mubr.bf16.mxu0 0
  %823 = vmatmul.mubr.bf16.gmra.mrb[0].mxu0 %v774
  %v824 = vpop.f32.mrb[0].mxu0
  %v825 = vadd.f32 %v665, %v824
  %v826 = vpop.f32.mrb[0].mxu0
  %v827 = vpop.f32.mrb[0].mxu0
  %v828 = vadd.f32 %v670, %v827
  %v829 = vpop.f32.mrb[0].mxu0
  %830 = vmatprep.mubr.bf16.mxu0 0
  %831 = vmatmul.mubr.bf16.gmra.mrb[0].mxu0 %v775
  %v832 = vpop.f32.mrb[0].mxu0
  %v833 = vadd.f32 %v675, %v832
  %v834 = vpop.f32.mrb[0].mxu0
  %v835 = vpop.f32.mrb[0].mxu0
  %v836 = vadd.f32 %v680, %v835
  %v837 = vpop.f32.mrb[0].mxu0
  %838 = vmatprep.mubr.bf16.mxu0 0
  %839 = vmatmul.mubr.bf16.gmra.mrb[0].mxu0 %v776
  %v840 = vpop.f32.mrb[0].mxu0
  %v841 = vadd.f32 %v685, %v840
  %v842 = vpop.f32.mrb[0].mxu0
  %v843 = vpop.f32.mrb[0].mxu0
  %v844 = vadd.f32 %v690, %v843
  %v845 = vpop.f32.mrb[0].mxu0
  %846 = vmatprep.mubr.bf16.mxu0 0
  %847 = vmatmul.mubr.bf16.gmra.mrb[0].mxu0 %v777
  %v848 = vpop.f32.mrb[0].mxu0
  %v849 = vadd.f32 %v695, %v848
  %v850 = vpop.f32.mrb[0].mxu0
  %v851 = vpop.f32.mrb[0].mxu0
  %v852 = vadd.f32 %v700, %v851
  %v853 = vpop.f32.mrb[0].mxu0
  %854 = vmatprep.mubr.bf16.mxu0 0
  %855 = vmatmul.mubr.bf16.gmra.mrb[0].mxu0 %v778
  %v856 = vpop.f32.mrb[0].mxu0
  %v857 = vadd.f32 %v705, %v856
  %v858 = vpop.f32.mrb[0].mxu0
  %v859 = vpop.f32.mrb[0].mxu0
  %v860 = vadd.f32 %v710, %v859
  %v861 = vpop.f32.mrb[0].mxu0
  %862 = vmatprep.mubr.bf16.mxu0 0
  %863 = vmatmul.mubr.bf16.gmra.mrb[0].mxu0 %v779
  %v864 = vpop.f32.mrb[0].mxu0
  %v865 = vadd.f32 %v715, %v864
  %v866 = vpop.f32.mrb[0].mxu0
  %v867 = vpop.f32.mrb[0].mxu0
  %v868 = vadd.f32 %v720, %v867
  %v869 = vpop.f32.mrb[0].mxu0
  %870 = vmatprep.mubr.bf16.mxu0 0
  %871 = vmatmul.mubr.bf16.gmra.mrb[0].mxu0 %v780
  %v872 = vpop.f32.mrb[0].mxu0
  %v873 = vadd.f32 %v725, %v872
  %v874 = vpop.f32.mrb[0].mxu0
  %v875 = vpop.f32.mrb[0].mxu0
  %v876 = vadd.f32 %v730, %v875
  %v877 = vpop.f32.mrb[0].mxu0
  %878 = vmatprep.mubr.bf16.mxu0 0
  %879 = vmatmul.mubr.bf16.gmra.mrb[0].mxu0 %v781
  %v880 = vpop.f32.mrb[0].mxu0
  %v881 = vadd.f32 %v735, %v880
  %v882 = vpop.f32.mrb[0].mxu0
  %v883 = vpop.f32.mrb[0].mxu0
  %v884 = vadd.f32 %v740, %v883
  %v885 = vpop.f32.mrb[0].mxu0
  %886 = vdwg.mxu0
  %v887 = vmax.f32 %v825, 0.0
  %v888 = vmax.f32 %v828, 0.0
  %v889 = vmax.f32 %v833, 0.0
  %v890 = vmax.f32 %v836, 0.0
  %v891 = vmax.f32 %v841, 0.0
  %v892 = vmax.f32 %v844, 0.0
  %v893 = vmax.f32 %v849, 0.0
  %v894 = vmax.f32 %v852, 0.0
  %v895 = vmax.f32 %v857, 0.0
  %v896 = vmax.f32 %v860, 0.0
  %v897 = vmax.f32 %v865, 0.0
  %v898 = vmax.f32 %v868, 0.0
  %v899 = vmax.f32 %v873, 0.0
  %v900 = vmax.f32 %v876, 0.0
  %v901 = vmax.f32 %v881, 0.0
  %v902 = vmax.f32 %v884, 0.0
  %s903 = scalar_lea.vmem %s2, 128
  %v904 = vld [vmem:[%s903] sm:$0xf]
  %v905 = vld [vmem:[%s903 + $0x4] sm:$0xf]
  %v906 = vld [vmem:[%s903 + $0x8] sm:$0xf]
  %v907 = vld [vmem:[%s903 + $0xc] sm:$0xf]
  %v908 = vld [vmem:[%s903 + $0x10] sm:$0xf]
  %v909 = vld [vmem:[%s903 + $0x14] sm:$0xf]
  %v910 = vld [vmem:[%s903 + $0x18] sm:$0xf]
  %v911 = vld [vmem:[%s903 + $0x1c] sm:$0xf]
  %v912 = vld [vmem:[%s903 + $0x20] sm:$0xf]
  %v913 = vld [vmem:[%s903 + $0x24] sm:$0xf]
  %v914 = vld [vmem:[%s903 + $0x28] sm:$0xf]
  %v915 = vld [vmem:[%s903 + $0x2c] sm:$0xf]
  %v916 = vld [vmem:[%s903 + $0x30] sm:$0xf]
  %v917 = vld [vmem:[%s903 + $0x34] sm:$0xf]
  %v918 = vld [vmem:[%s903 + $0x38] sm:$0xf]
  %v919 = vld [vmem:[%s903 + $0x3c] sm:$0xf]
  %v920 = vpack.c.bf16 %v888, %v887
  %v921 = vpack.c.bf16 %v890, %v889
  %v922 = vpack.c.bf16 %v892, %v891
  %v923 = vpack.c.bf16 %v894, %v893
  %v924 = vpack.c.bf16 %v896, %v895
  %v925 = vpack.c.bf16 %v898, %v897
  %v926 = vpack.c.bf16 %v900, %v899
  %v927 = vpack.c.bf16 %v902, %v901
  %s928 = scalar_lea.vmem %s3, 256
  %v929 = vld [vmem:[%s928] sm:$0xff]
  %v930 = vld [vmem:[%s928 + $0x8] sm:$0xff]
  %v931 = vld [vmem:[%s928 + $0x10] sm:$0xff]
  %v932 = vld [vmem:[%s928 + $0x18] sm:$0xff]
  %v933 = vld [vmem:[%s928 + $0x20] sm:$0xff]
  %v934 = vld [vmem:[%s928 + $0x28] sm:$0xff]
  %v935 = vld [vmem:[%s928 + $0x30] sm:$0xff]
  %v936 = vld [vmem:[%s928 + $0x38] sm:$0xff]
  %v937 = vld [vmem:[%s928 + $0x40] sm:$0xff]
  %v938 = vld [vmem:[%s928 + $0x48] sm:$0xff]
  %v939 = vld [vmem:[%s928 + $0x50] sm:$0xff]
  %v940 = vld [vmem:[%s928 + $0x58] sm:$0xff]
  %v941 = vld [vmem:[%s928 + $0x60] sm:$0xff]
  %v942 = vld [vmem:[%s928 + $0x68] sm:$0xff]
  %v943 = vld [vmem:[%s928 + $0x70] sm:$0xff]
  %v944 = vld [vmem:[%s928 + $0x78] sm:$0xff]
  %946 = vset.pattern.permute.xlu0 0
  %947 = vperm.xlu0 %946, %v929
  %v948 = vpop.permute.xlu0 %947
  %951 = vset.pattern.permute.xlu0 0
  %952 = vperm.xlu0 %951, %v930
  %v953 = vpop.permute.xlu0 %952
  %956 = vset.pattern.permute.xlu0 0
  %957 = vperm.xlu0 %956, %v931
  %v958 = vpop.permute.xlu0 %957
  %961 = vset.pattern.permute.xlu0 0
  %962 = vperm.xlu0 %961, %v932
  %v963 = vpop.permute.xlu0 %962
  %966 = vset.pattern.permute.xlu0 0
  %967 = vperm.xlu0 %966, %v933
  %v968 = vpop.permute.xlu0 %967
  %971 = vset.pattern.permute.xlu0 0
  %972 = vperm.xlu0 %971, %v934
  %v973 = vpop.permute.xlu0 %972
  %976 = vset.pattern.permute.xlu0 0
  %977 = vperm.xlu0 %976, %v935
  %v978 = vpop.permute.xlu0 %977
  %981 = vset.pattern.permute.xlu0 0
  %982 = vperm.xlu0 %981, %v936
  %v983 = vpop.permute.xlu0 %982
  %986 = vset.pattern.permute.xlu0 0
  %987 = vperm.xlu0 %986, %v937
  %v988 = vpop.permute.xlu0 %987
  %991 = vset.pattern.permute.xlu0 0
  %992 = vperm.xlu0 %991, %v938
  %v993 = vpop.permute.xlu0 %992
  %996 = vset.pattern.permute.xlu0 0
  %997 = vperm.xlu0 %996, %v939
  %v998 = vpop.permute.xlu0 %997
  %1001 = vset.pattern.permute.xlu0 0
  %1002 = vperm.xlu0 %1001, %v940
  %v1003 = vpop.permute.xlu0 %1002
  %1006 = vset.pattern.permute.xlu0 0
  %1007 = vperm.xlu0 %1006, %v941
  %v1008 = vpop.permute.xlu0 %1007
  %1011 = vset.pattern.permute.xlu0 0
  %1012 = vperm.xlu0 %1011, %v942
  %v1013 = vpop.permute.xlu0 %1012
  %1016 = vset.pattern.permute.xlu0 0
  %1017 = vperm.xlu0 %1016, %v943
  %v1018 = vpop.permute.xlu0 %1017
  %1021 = vset.pattern.permute.xlu0 0
  %1022 = vperm.xlu0 %1021, %v944
  %v1023 = vpop.permute.xlu0 %1022
  %v1041 = vunpack.c.l.b16 %v904
  %v1042 = vunpack.c.l.b16 %v905
  %v1043 = vunpack.c.l.b16 %v906
  %v1044 = vunpack.c.l.b16 %v907
  %v1045 = vunpack.c.l.b16 %v908
  %v1046 = vunpack.c.l.b16 %v909
  %v1047 = vunpack.c.l.b16 %v910
  %v1048 = vunpack.c.l.b16 %v911
  %v1049 = vunpack.c.l.b16 %v912
  %v1050 = vunpack.c.l.b16 %v913
  %v1051 = vunpack.c.l.b16 %v914
  %v1052 = vunpack.c.l.b16 %v915
  %v1053 = vunpack.c.l.b16 %v916
  %v1054 = vunpack.c.l.b16 %v917
  %v1055 = vunpack.c.l.b16 %v918
  %v1056 = vunpack.c.l.b16 %v919
  %v1057 = vpack.c.b16 %v1042, %v1041
  %v1058 = vpack.c.b16 %v1044, %v1043
  %v1059 = vpack.c.b16 %v1046, %v1045
  %v1060 = vpack.c.b16 %v1048, %v1047
  %v1061 = vpack.c.b16 %v1050, %v1049
  %v1062 = vpack.c.b16 %v1052, %v1051
  %v1063 = vpack.c.b16 %v1054, %v1053
  %v1064 = vpack.c.b16 %v1056, %v1055
  %1073 = vmatprep.subr.bf16.mxu0 0
  %1074 = vmatpush1.bf16.msra.mxu0 %v920
  %1075 = vmatprep.subr.bf16.mxu0 0
  %1076 = vmatpush1.bf16.msra.mxu0 %v921
  %1077 = vmatprep.subr.bf16.mxu0 0
  %1078 = vmatpush1.bf16.msra.mxu0 %v922
  %1079 = vmatprep.subr.bf16.mxu0 0
  %1080 = vmatpush1.bf16.msra.mxu0 %v923
  %1081 = vmatprep.subr.bf16.mxu0 0
  %1082 = vmatpush1.bf16.msra.mxu0 %v924
  %1083 = vmatprep.subr.bf16.mxu0 0
  %1084 = vmatpush1.bf16.msra.mxu0 %v925
  %1085 = vmatprep.subr.bf16.mxu0 0
  %1086 = vmatpush1.bf16.msra.mxu0 %v926
  %1087 = vmatprep.subr.bf16.mxu0 0
  %1088 = vmatpush1.bf16.msra.mxu0 %v927
  %1089 = vmatprep.subr.bf16.mxu0 0
  %1090 = vmatpush1.bf16.msra.mxu0 0
  %1091 = vmatprep.subr.bf16.mxu0 0
  %1092 = vmatpush1.bf16.msra.mxu0 0
  %1093 = vmatprep.subr.bf16.mxu0 0
  %1094 = vmatpush1.bf16.msra.mxu0 0
  %1095 = vmatprep.subr.bf16.mxu0 0
  %1096 = vmatpush1.bf16.msra.mxu0 0
  %1097 = vmatprep.subr.bf16.mxu0 0
  %1098 = vmatpush1.bf16.msra.mxu0 0
  %1099 = vmatprep.subr.bf16.mxu0 0
  %1100 = vmatpush1.bf16.msra.mxu0 0
  %1101 = vmatprep.subr.bf16.mxu0 0
  %1102 = vmatpush1.bf16.msra.mxu0 0
  %1103 = vmatprep.subr.bf16.mxu0 0
  %1104 = vmatpush1.bf16.msra.mxu0 0
  %1105 = vmatprep.mubr.bf16.mxu0 0
  %1106 = vmatmul.mubr.bf16.gmra.mrb[0].mxu0 %v1057
  %v1107 = vpop.f32.mrb[0].mxu0
  %v1108 = vadd.f32 %v948, %v1107
  %v1109 = vpop.f32.mrb[0].mxu0
  %v1110 = vpop.f32.mrb[0].mxu0
  %v1111 = vadd.f32 %v953, %v1110
  %v1112 = vpop.f32.mrb[0].mxu0
  %1113 = vmatprep.mubr.bf16.mxu0 0
  %1114 = vmatmul.mubr.bf16.gmra.mrb[0].mxu0 %v1058
  %v1115 = vpop.f32.mrb[0].mxu0
  %v1116 = vadd.f32 %v958, %v1115
  %v1117 = vpop.f32.mrb[0].mxu0
  %v1118 = vpop.f32.mrb[0].mxu0
  %v1119 = vadd.f32 %v963, %v1118
  %v1120 = vpop.f32.mrb[0].mxu0
  %1121 = vmatprep.mubr.bf16.mxu0 0
  %1122 = vmatmul.mubr.bf16.gmra.mrb[0].mxu0 %v1059
  %v1123 = vpop.f32.mrb[0].mxu0
  %v1124 = vadd.f32 %v968, %v1123
  %v1125 = vpop.f32.mrb[0].mxu0
  %v1126 = vpop.f32.mrb[0].mxu0
  %v1127 = vadd.f32 %v973, %v1126
  %v1128 = vpop.f32.mrb[0].mxu0
  %1129 = vmatprep.mubr.bf16.mxu0 0
  %1130 = vmatmul.mubr.bf16.gmra.mrb[0].mxu0 %v1060
  %v1131 = vpop.f32.mrb[0].mxu0
  %v1132 = vadd.f32 %v978, %v1131
  %v1133 = vpop.f32.mrb[0].mxu0
  %v1134 = vpop.f32.mrb[0].mxu0
  %v1135 = vadd.f32 %v983, %v1134
  %v1136 = vpop.f32.mrb[0].mxu0
  %1137 = vmatprep.mubr.bf16.mxu0 0
  %1138 = vmatmul.mubr.bf16.gmra.mrb[0].mxu0 %v1061
  %v1139 = vpop.f32.mrb[0].mxu0
  %v1140 = vadd.f32 %v988, %v1139
  %v1141 = vpop.f32.mrb[0].mxu0
  %v1142 = vpop.f32.mrb[0].mxu0
  %v1143 = vadd.f32 %v993, %v1142
  %v1144 = vpop.f32.mrb[0].mxu0
  %1145 = vmatprep.mubr.bf16.mxu0 0
  %1146 = vmatmul.mubr.bf16.gmra.mrb[0].mxu0 %v1062
  %v1147 = vpop.f32.mrb[0].mxu0
  %v1148 = vadd.f32 %v998, %v1147
  %v1149 = vpop.f32.mrb[0].mxu0
  %v1150 = vpop.f32.mrb[0].mxu0
  %v1151 = vadd.f32 %v1003, %v1150
  %v1152 = vpop.f32.mrb[0].mxu0
  %1153 = vmatprep.mubr.bf16.mxu0 0
  %1154 = vmatmul.mubr.bf16.gmra.mrb[0].mxu0 %v1063
  %v1155 = vpop.f32.mrb[0].mxu0
  %v1156 = vadd.f32 %v1008, %v1155
  %v1157 = vpop.f32.mrb[0].mxu0
  %v1158 = vpop.f32.mrb[0].mxu0
  %v1159 = vadd.f32 %v1013, %v1158
  %v1160 = vpop.f32.mrb[0].mxu0
  %1161 = vmatprep.mubr.bf16.mxu0 0
  %1162 = vmatmul.mubr.bf16.gmra.mrb[0].mxu0 %v1064
  %v1163 = vpop.f32.mrb[0].mxu0
  %v1164 = vadd.f32 %v1018, %v1163
  %v1165 = vpop.f32.mrb[0].mxu0
  %v1166 = vpop.f32.mrb[0].mxu0
  %v1167 = vadd.f32 %v1023, %v1166
  %v1168 = vpop.f32.mrb[0].mxu0
  %1169 = vdwg.mxu0
  %v1170 = vmax.f32 %v1108, 0.0
  %v1171 = vmax.f32 %v1111, 0.0
  %v1172 = vmax.f32 %v1116, 0.0
  %v1173 = vmax.f32 %v1119, 0.0
  %v1174 = vmax.f32 %v1124, 0.0
  %v1175 = vmax.f32 %v1127, 0.0
  %v1176 = vmax.f32 %v1132, 0.0
  %v1177 = vmax.f32 %v1135, 0.0
  %v1178 = vmax.f32 %v1140, 0.0
  %v1179 = vmax.f32 %v1143, 0.0
  %v1180 = vmax.f32 %v1148, 0.0
  %v1181 = vmax.f32 %v1151, 0.0
  %v1182 = vmax.f32 %v1156, 0.0
  %v1183 = vmax.f32 %v1159, 0.0
  %v1184 = vmax.f32 %v1164, 0.0
  %v1185 = vmax.f32 %v1167, 0.0
  %s1186 = scalar_lea.vmem %s2, 192
  %v1187 = vld [vmem:[%s1186] sm:$0xf]
  %v1188 = vld [vmem:[%s1186 + $0x4] sm:$0xf]
  %v1189 = vld [vmem:[%s1186 + $0x8] sm:$0xf]
  %v1190 = vld [vmem:[%s1186 + $0xc] sm:$0xf]
  %v1191 = vld [vmem:[%s1186 + $0x10] sm:$0xf]
  %v1192 = vld [vmem:[%s1186 + $0x14] sm:$0xf]
  %v1193 = vld [vmem:[%s1186 + $0x18] sm:$0xf]
  %v1194 = vld [vmem:[%s1186 + $0x1c] sm:$0xf]
  %v1195 = vld [vmem:[%s1186 + $0x20] sm:$0xf]
  %v1196 = vld [vmem:[%s1186 + $0x24] sm:$0xf]
  %v1197 = vld [vmem:[%s1186 + $0x28] sm:$0xf]
  %v1198 = vld [vmem:[%s1186 + $0x2c] sm:$0xf]
  %v1199 = vld [vmem:[%s1186 + $0x30] sm:$0xf]
  %v1200 = vld [vmem:[%s1186 + $0x34] sm:$0xf]
  %v1201 = vld [vmem:[%s1186 + $0x38] sm:$0xf]
  %v1202 = vld [vmem:[%s1186 + $0x3c] sm:$0xf]
  %v1203 = vpack.c.bf16 %v1171, %v1170
  %v1204 = vpack.c.bf16 %v1173, %v1172
  %v1205 = vpack.c.bf16 %v1175, %v1174
  %v1206 = vpack.c.bf16 %v1177, %v1176
  %v1207 = vpack.c.bf16 %v1179, %v1178
  %v1208 = vpack.c.bf16 %v1181, %v1180
  %v1209 = vpack.c.bf16 %v1183, %v1182
  %v1210 = vpack.c.bf16 %v1185, %v1184
  %s1211 = scalar_lea.vmem %s3, 384
  %v1212 = vld [vmem:[%s1211] sm:$0xff]
  %v1213 = vld [vmem:[%s1211 + $0x8] sm:$0xff]
  %v1214 = vld [vmem:[%s1211 + $0x10] sm:$0xff]
  %v1215 = vld [vmem:[%s1211 + $0x18] sm:$0xff]
  %v1216 = vld [vmem:[%s1211 + $0x20] sm:$0xff]
  %v1217 = vld [vmem:[%s1211 + $0x28] sm:$0xff]
  %v1218 = vld [vmem:[%s1211 + $0x30] sm:$0xff]
  %v1219 = vld [vmem:[%s1211 + $0x38] sm:$0xff]
  %v1220 = vld [vmem:[%s1211 + $0x40] sm:$0xff]
  %v1221 = vld [vmem:[%s1211 + $0x48] sm:$0xff]
  %v1222 = vld [vmem:[%s1211 + $0x50] sm:$0xff]
  %v1223 = vld [vmem:[%s1211 + $0x58] sm:$0xff]
  %v1224 = vld [vmem:[%s1211 + $0x60] sm:$0xff]
  %v1225 = vld [vmem:[%s1211 + $0x68] sm:$0xff]
  %v1226 = vld [vmem:[%s1211 + $0x70] sm:$0xff]
  %v1227 = vld [vmem:[%s1211 + $0x78] sm:$0xff]
  %1229 = vset.pattern.permute.xlu0 0
  %1230 = vperm.xlu0 %1229, %v1212
  %v1231 = vpop.permute.xlu0 %1230
  %1234 = vset.pattern.permute.xlu0 0
  %1235 = vperm.xlu0 %1234, %v1213
  %v1236 = vpop.permute.xlu0 %1235
  %1239 = vset.pattern.permute.xlu0 0
  %1240 = vperm.xlu0 %1239, %v1214
  %v1241 = vpop.permute.xlu0 %1240
  %1244 = vset.pattern.permute.xlu0 0
  %1245 = vperm.xlu0 %1244, %v1215
  %v1246 = vpop.permute.xlu0 %1245
  %1249 = vset.pattern.permute.xlu0 0
  %1250 = vperm.xlu0 %1249, %v1216
  %v1251 = vpop.permute.xlu0 %1250
  %1254 = vset.pattern.permute.xlu0 0
  %1255 = vperm.xlu0 %1254, %v1217
  %v1256 = vpop.permute.xlu0 %1255
  %1259 = vset.pattern.permute.xlu0 0
  %1260 = vperm.xlu0 %1259, %v1218
  %v1261 = vpop.permute.xlu0 %1260
  %1264 = vset.pattern.permute.xlu0 0
  %1265 = vperm.xlu0 %1264, %v1219
  %v1266 = vpop.permute.xlu0 %1265
  %1269 = vset.pattern.permute.xlu0 0
  %1270 = vperm.xlu0 %1269, %v1220
  %v1271 = vpop.permute.xlu0 %1270
  %1274 = vset.pattern.permute.xlu0 0
  %1275 = vperm.xlu0 %1274, %v1221
  %v1276 = vpop.permute.xlu0 %1275
  %1279 = vset.pattern.permute.xlu0 0
  %1280 = vperm.xlu0 %1279, %v1222
  %v1281 = vpop.permute.xlu0 %1280
  %1284 = vset.pattern.permute.xlu0 0
  %1285 = vperm.xlu0 %1284, %v1223
  %v1286 = vpop.permute.xlu0 %1285
  %1289 = vset.pattern.permute.xlu0 0
  %1290 = vperm.xlu0 %1289, %v1224
  %v1291 = vpop.permute.xlu0 %1290
  %1294 = vset.pattern.permute.xlu0 0
  %1295 = vperm.xlu0 %1294, %v1225
  %v1296 = vpop.permute.xlu0 %1295
  %1299 = vset.pattern.permute.xlu0 0
  %1300 = vperm.xlu0 %1299, %v1226
  %v1301 = vpop.permute.xlu0 %1300
  %1304 = vset.pattern.permute.xlu0 0
  %1305 = vperm.xlu0 %1304, %v1227
  %v1306 = vpop.permute.xlu0 %1305
  %v1324 = vunpack.c.l.b16 %v1187
  %v1325 = vunpack.c.l.b16 %v1188
  %v1326 = vunpack.c.l.b16 %v1189
  %v1327 = vunpack.c.l.b16 %v1190
  %v1328 = vunpack.c.l.b16 %v1191
  %v1329 = vunpack.c.l.b16 %v1192
  %v1330 = vunpack.c.l.b16 %v1193
  %v1331 = vunpack.c.l.b16 %v1194
  %v1332 = vunpack.c.l.b16 %v1195
  %v1333 = vunpack.c.l.b16 %v1196
  %v1334 = vunpack.c.l.b16 %v1197
  %v1335 = vunpack.c.l.b16 %v1198
  %v1336 = vunpack.c.l.b16 %v1199
  %v1337 = vunpack.c.l.b16 %v1200
  %v1338 = vunpack.c.l.b16 %v1201
  %v1339 = vunpack.c.l.b16 %v1202
  %v1340 = vpack.c.b16 %v1325, %v1324
  %v1341 = vpack.c.b16 %v1327, %v1326
  %v1342 = vpack.c.b16 %v1329, %v1328
  %v1343 = vpack.c.b16 %v1331, %v1330
  %v1344 = vpack.c.b16 %v1333, %v1332
  %v1345 = vpack.c.b16 %v1335, %v1334
  %v1346 = vpack.c.b16 %v1337, %v1336
  %v1347 = vpack.c.b16 %v1339, %v1338
  %1356 = vmatprep.subr.bf16.mxu0 0
  %1357 = vmatpush1.bf16.msra.mxu0 %v1203
  %1358 = vmatprep.subr.bf16.mxu0 0
  %1359 = vmatpush1.bf16.msra.mxu0 %v1204
  %1360 = vmatprep.subr.bf16.mxu0 0
  %1361 = vmatpush1.bf16.msra.mxu0 %v1205
  %1362 = vmatprep.subr.bf16.mxu0 0
  %1363 = vmatpush1.bf16.msra.mxu0 %v1206
  %1364 = vmatprep.subr.bf16.mxu0 0
  %1365 = vmatpush1.bf16.msra.mxu0 %v1207
  %1366 = vmatprep.subr.bf16.mxu0 0
  %1367 = vmatpush1.bf16.msra.mxu0 %v1208
  %1368 = vmatprep.subr.bf16.mxu0 0
  %1369 = vmatpush1.bf16.msra.mxu0 %v1209
  %1370 = vmatprep.subr.bf16.mxu0 0
  %1371 = vmatpush1.bf16.msra.mxu0 %v1210
  %1372 = vmatprep.subr.bf16.mxu0 0
  %1373 = vmatpush1.bf16.msra.mxu0 0
  %1374 = vmatprep.subr.bf16.mxu0 0
  %1375 = vmatpush1.bf16.msra.mxu0 0
  %1376 = vmatprep.subr.bf16.mxu0 0
  %1377 = vmatpush1.bf16.msra.mxu0 0
  %1378 = vmatprep.subr.bf16.mxu0 0
  %1379 = vmatpush1.bf16.msra.mxu0 0
  %1380 = vmatprep.subr.bf16.mxu0 0
  %1381 = vmatpush1.bf16.msra.mxu0 0
  %1382 = vmatprep.subr.bf16.mxu0 0
  %1383 = vmatpush1.bf16.msra.mxu0 0
  %1384 = vmatprep.subr.bf16.mxu0 0
  %1385 = vmatpush1.bf16.msra.mxu0 0
  %1386 = vmatprep.subr.bf16.mxu0 0
  %1387 = vmatpush1.bf16.msra.mxu0 0
  %1388 = vmatprep.mubr.bf16.mxu0 0
  %1389 = vmatmul.mubr.bf16.gmra.mrb[0].mxu0 %v1340
  %v1390 = vpop.f32.mrb[0].mxu0
  %v1391 = vadd.f32 %v1231, %v1390
  %v1392 = vpop.f32.mrb[0].mxu0
  %v1393 = vpop.f32.mrb[0].mxu0
  %v1394 = vadd.f32 %v1236, %v1393
  %v1395 = vpop.f32.mrb[0].mxu0
  %1396 = vmatprep.mubr.bf16.mxu0 0
  %1397 = vmatmul.mubr.bf16.gmra.mrb[0].mxu0 %v1341
  %v1398 = vpop.f32.mrb[0].mxu0
  %v1399 = vadd.f32 %v1241, %v1398
  %v1400 = vpop.f32.mrb[0].mxu0
  %v1401 = vpop.f32.mrb[0].mxu0
  %v1402 = vadd.f32 %v1246, %v1401
  %v1403 = vpop.f32.mrb[0].mxu0
  %1404 = vmatprep.mubr.bf16.mxu0 0
  %1405 = vmatmul.mubr.bf16.gmra.mrb[0].mxu0 %v1342
  %v1406 = vpop.f32.mrb[0].mxu0
  %v1407 = vadd.f32 %v1251, %v1406
  %v1408 = vpop.f32.mrb[0].mxu0
  %v1409 = vpop.f32.mrb[0].mxu0
  %v1410 = vadd.f32 %v1256, %v1409
  %v1411 = vpop.f32.mrb[0].mxu0
  %1412 = vmatprep.mubr.bf16.mxu0 0
  %1413 = vmatmul.mubr.bf16.gmra.mrb[0].mxu0 %v1343
  %v1414 = vpop.f32.mrb[0].mxu0
  %v1415 = vadd.f32 %v1261, %v1414
  %v1416 = vpop.f32.mrb[0].mxu0
  %v1417 = vpop.f32.mrb[0].mxu0
  %v1418 = vadd.f32 %v1266, %v1417
  %v1419 = vpop.f32.mrb[0].mxu0
  %1420 = vmatprep.mubr.bf16.mxu0 0
  %1421 = vmatmul.mubr.bf16.gmra.mrb[0].mxu0 %v1344
  %v1422 = vpop.f32.mrb[0].mxu0
  %v1423 = vadd.f32 %v1271, %v1422
  %v1424 = vpop.f32.mrb[0].mxu0
  %v1425 = vpop.f32.mrb[0].mxu0
  %v1426 = vadd.f32 %v1276, %v1425
  %v1427 = vpop.f32.mrb[0].mxu0
  %1428 = vmatprep.mubr.bf16.mxu0 0
  %1429 = vmatmul.mubr.bf16.gmra.mrb[0].mxu0 %v1345
  %v1430 = vpop.f32.mrb[0].mxu0
  %v1431 = vadd.f32 %v1281, %v1430
  %v1432 = vpop.f32.mrb[0].mxu0
  %v1433 = vpop.f32.mrb[0].mxu0
  %v1434 = vadd.f32 %v1286, %v1433
  %v1435 = vpop.f32.mrb[0].mxu0
  %1436 = vmatprep.mubr.bf16.mxu0 0
  %1437 = vmatmul.mubr.bf16.gmra.mrb[0].mxu0 %v1346
  %v1438 = vpop.f32.mrb[0].mxu0
  %v1439 = vadd.f32 %v1291, %v1438
  %v1440 = vpop.f32.mrb[0].mxu0
  %v1441 = vpop.f32.mrb[0].mxu0
  %v1442 = vadd.f32 %v1296, %v1441
  %v1443 = vpop.f32.mrb[0].mxu0
  %1444 = vmatprep.mubr.bf16.mxu0 0
  %1445 = vmatmul.mubr.bf16.gmra.mrb[0].mxu0 %v1347
  %v1446 = vpop.f32.mrb[0].mxu0
  %v1447 = vadd.f32 %v1301, %v1446
  %v1448 = vpop.f32.mrb[0].mxu0
  %v1449 = vpop.f32.mrb[0].mxu0
  %v1450 = vadd.f32 %v1306, %v1449
  %v1451 = vpop.f32.mrb[0].mxu0
  %1452 = vdwg.mxu0
  %v1453 = vmax.f32 %v1391, 0.0
  %v1454 = vmax.f32 %v1394, 0.0
  %v1455 = vmax.f32 %v1399, 0.0
  %v1456 = vmax.f32 %v1402, 0.0
  %v1457 = vmax.f32 %v1407, 0.0
  %v1458 = vmax.f32 %v1410, 0.0
  %v1459 = vmax.f32 %v1415, 0.0
  %v1460 = vmax.f32 %v1418, 0.0
  %v1461 = vmax.f32 %v1423, 0.0
  %v1462 = vmax.f32 %v1426, 0.0
  %v1463 = vmax.f32 %v1431, 0.0
  %v1464 = vmax.f32 %v1434, 0.0
  %v1465 = vmax.f32 %v1439, 0.0
  %v1466 = vmax.f32 %v1442, 0.0
  %v1467 = vmax.f32 %v1447, 0.0
  %v1468 = vmax.f32 %v1450, 0.0
  %v1469 = vld [vmem:[%s4] sm:$0x3]
  %v1470 = vpack.c.bf16 %v1454, %v1453
  %v1471 = vpack.c.bf16 %v1456, %v1455
  %v1472 = vpack.c.bf16 %v1458, %v1457
  %v1473 = vpack.c.bf16 %v1460, %v1459
  %v1474 = vpack.c.bf16 %v1462, %v1461
  %v1475 = vpack.c.bf16 %v1464, %v1463
  %v1476 = vpack.c.bf16 %v1466, %v1465
  %v1477 = vpack.c.bf16 %v1468, %v1467
  %1478 = vmatprep.subr.bf16.mxu0 0
  %1479 = vmatpush1.bf16.msra.mxu0 %v1470
  %1480 = vmatprep.subr.bf16.mxu0 0
  %1481 = vmatpush1.bf16.msra.mxu0 %v1471
  %1482 = vmatprep.subr.bf16.mxu0 0
  %1483 = vmatpush1.bf16.msra.mxu0 %v1472
  %1484 = vmatprep.subr.bf16.mxu0 0
  %1485 = vmatpush1.bf16.msra.mxu0 %v1473
  %1486 = vmatprep.subr.bf16.mxu0 0
  %1487 = vmatpush1.bf16.msra.mxu0 %v1474
  %1488 = vmatprep.subr.bf16.mxu0 0
  %1489 = vmatpush1.bf16.msra.mxu0 %v1475
  %1490 = vmatprep.subr.bf16.mxu0 0
  %1491 = vmatpush1.bf16.msra.mxu0 %v1476
  %1492 = vmatprep.subr.bf16.mxu0 0
  %1493 = vmatpush1.bf16.msra.mxu0 %v1477
  %1494 = vmatprep.subr.bf16.mxu0 0
  %1495 = vmatpush1.bf16.msra.mxu0 0
  %1496 = vmatprep.subr.bf16.mxu0 0
  %1497 = vmatpush1.bf16.msra.mxu0 0
  %1498 = vmatprep.subr.bf16.mxu0 0
  %1499 = vmatpush1.bf16.msra.mxu0 0
  %1500 = vmatprep.subr.bf16.mxu0 0
  %1501 = vmatpush1.bf16.msra.mxu0 0
  %1502 = vmatprep.subr.bf16.mxu0 0
  %1503 = vmatpush1.bf16.msra.mxu0 0
  %1504 = vmatprep.subr.bf16.mxu0 0
  %1505 = vmatpush1.bf16.msra.mxu0 0
  %1506 = vmatprep.subr.bf16.mxu0 0
  %1507 = vmatpush1.bf16.msra.mxu0 0
  %1508 = vmatprep.subr.bf16.mxu0 0
  %1509 = vmatpush1.bf16.msra.mxu0 0
  %1510 = vmatprep.mubr.bf16.mxu0 0
  %1511 = vmatmul.mubr.bf16.gmra.mrb[0].mxu0 %v1469
  %v1512 = vpop.f32.mrb[0].mxu0
  %v1513 = vadd.f32 0.0, %v1512
  %v1514 = vpop.f32.mrb[0].mxu0
  %v1515 = vpop.f32.mrb[0].mxu0
  %v1516 = vpop.f32.mrb[0].mxu0
  %1517 = vdwg.mxu0
  %1518 = vst [vmem:[%s5] sm:$0x7] %v1513
  // Predicated region
  $region22: #{quadratic_head_forward.1} parent=0 // pred_check
    _
  $region23: #{quadratic_head_forward.1} parent=0 // pred_check_branch
    %1520 = sbr.rel (0) target = $region25
  $region24: #{quadratic_head_forward.1} parent=0 // pred_region
    _
  $region25: #{quadratic_head_forward.1} parent=0 // pred_fallthru
    _
  // Predicated region
  $region26: #{quadratic_head_forward.1} parent=0 // pred_check
    _
  $region27: #{quadratic_head_forward.1} parent=0 // pred_check_branch
    %1522 = sbr.rel (0) target = $region29
  $region28: #{quadratic_head_forward.1} parent=0 // pred_region
    _
  $region29: #{quadratic_head_forward.1} parent=0 // pred_fallthru
    _

</llo_original>
